<compile_context>
chip_gen: v6e
topology: v6e:2x2x1
jax: 0.10.0
libtpu: 0.0.40
codegen_flags: <defaults>
</compile_context>

<pallas_src>
import functools

import jax
import jax.numpy as jnp
import numpy as np
from jax.experimental import pallas as pl
from jax.experimental.pallas import tpu as pltpu

LEAKY_SLOPE = 0.01      # nn.LeakyReLU() default
BN_EPS = 1e-5
STD_EPS = 1e-8          # numerical safety inside sqrt for the pooled std


def _const_index_map(rank):
    zeros = (0,) * rank
    return lambda i: zeros


# ------------------------------ fused kernel -------------------------------

def xvector_kernel(x_ref, *refs, channels, kernels, dilations, seq_len, bblk,
                   n_embed):
    """Fused Xvector forward for `bblk` batch elements (one grid step).

    refs = (conv_w[0..n_blocks-1], l1w, l2w, param_slab, out_ref)
    x_ref     : (bblk*seq_len, n_mels)  channels-last, channels on the lane axis
    conv_w[i] : (k_i, Cin_i, Cout_i)    bf16
    l1w       : (2*C_last, E) f32 ; l2w : (E, E) f32
    param_slab: (rows, lane_max) f32    rows = [b, bn_sc, bn_sh] per conv block
                                        then l1b,l1sc,l1sh,l2b,l2sc,l2sh
    """
    out_ref = refs[-1]
    pvec_ref = refs[-2]
    l2w_ref = refs[-3]
    l1w_ref = refs[-4]
    conv_w = refs[:-4]

    n = bblk * seq_len
    # Flat (bblk*T, C) activation slab; each batch element owns a fixed
    # seq_len-row block.  Valid rows shrink per layer; tail rows carry garbage
    # that is masked out at the pooling step.
    h = x_ref[...].astype(jnp.float32)

    t_valid = seq_len
    for i, (cout, k, d) in enumerate(zip(channels, kernels, dilations)):
        w_ref = conv_w[i]
        hb = h.astype(jnp.bfloat16)          # cast ONCE per block, not per tap
        # 'valid' Conv1d as K per-tap MXU matmuls over ALL bblk*T rows; each
        # tap product is re-aligned with an XLU roll (no misaligned sublane
        # slices, no relayout copies).
        acc = jnp.dot(hb, w_ref[0], preferred_element_type=jnp.float32)
        for kk in range(1, k):
            p = jnp.dot(hb, w_ref[kk], preferred_element_type=jnp.float32)
            # want out[r] = p[r + kk*d]  ->  jnp.roll-style shift of -(kk*d),
            # expressed as the equivalent non-negative rotation n - kk*d.
            acc = acc + pltpu.roll(p, n - kk * d, axis=0)
        t_valid = t_valid - (k - 1) * d

        r = 3 * i
        bias = pvec_ref[r:r + 1, 0:cout]
        sc = pvec_ref[r + 1:r + 2, 0:cout]
        sh = pvec_ref[r + 2:r + 3, 0:cout]
        z = acc + bias
        # LeakyReLU folded into the folded-BN scale (one fewer VPU pass):
        # BN(leaky(z)) = z * where(z>=0, sc, slope*sc) + sh
        h = z * jnp.where(z >= 0, sc, LEAKY_SLOPE * sc) + sh      # stays f32

    # ---- StatisticsPooling (eval mode): mean & unbiased std over time ----
    # Done for all bblk batch elements at once with a {0,1} selection matrix
    # and two small MXU matmuls (no per-batch slicing, no 3D reshapes).
    c = channels[-1]
    row = jax.lax.broadcasted_iota(jnp.int32, (bblk, n), 1)
    blk = jax.lax.broadcasted_iota(jnp.int32, (bblk, n), 0)
    start = blk * seq_len
    sel = ((row >= start) & (row < start + t_valid)).astype(jnp.float32)
    sums = jnp.dot(sel, h, preferred_element_type=jnp.float32)       # (bblk, C)
    sqs = jnp.dot(sel, h * h, preferred_element_type=jnp.float32)    # (bblk, C)
    inv_t = 1.0 / t_valid
    mean = sums * inv_t
    var = (sqs - t_valid * mean * mean) * (1.0 / (t_valid - 1))      # unbiased
    std = jnp.sqrt(jnp.maximum(var, 0.0) + STD_EPS)

    # ---- head: Linear(2C,E) -> LeakyReLU -> BN -> Linear(E,E) -> LReLU -> BN
    base = 3 * len(channels)
    l1b = pvec_ref[base + 0:base + 1, 0:n_embed]
    l1sc = pvec_ref[base + 1:base + 2, 0:n_embed]
    l1sh = pvec_ref[base + 2:base + 3, 0:n_embed]
    l2b = pvec_ref[base + 3:base + 4, 0:n_embed]
    l2sc = pvec_ref[base + 4:base + 5, 0:n_embed]
    l2sh = pvec_ref[base + 5:base + 6, 0:n_embed]

    # Weight split into mean/std halves: no lane-axis concat of the pooled
    # statistics; LHS kept f32 for accuracy (costs nothing at this size).
    z = (jnp.dot(mean, l1w_ref[0:c, :], preferred_element_type=jnp.float32)
         + jnp.dot(std, l1w_ref[c:2 * c, :], preferred_element_type=jnp.float32)
         + l1b)
    e = z * jnp.where(z >= 0, l1sc, LEAKY_SLOPE * l1sc) + l1sh

    z = jnp.dot(e, l2w_ref[...], preferred_element_type=jnp.float32) + l2b
    e = z * jnp.where(z >= 0, l2sc, LEAKY_SLOPE * l2sc) + l2sh

    out_ref[0] = e                                                   # (bblk, E)


# -------------------------------- wrapper ----------------------------------

def xvector_forward(x, conv_ws, l1w, l2w, pvec, *, channels, kernels,
                    dilations, n_embed):
    B, T, F = x.shape
    assert T % 8 == 0, "sequence length must be a multiple of 8 (sublane tile)"
    # Two grid steps (one per v7x TensorCore) when the batch splits evenly,
    # otherwise a single step; each step folds `bblk` batch elements into the
    # matmul M dimension.
    n_steps = 2 if (B % 2 == 0 and B >= 2) else 1
    bblk = B // n_steps

    x2 = x.reshape(B * T, F)          # contiguous reshape, channels on lanes

    kern = functools.partial(
        xvector_kernel, channels=tuple(channels), kernels=tuple(kernels),
        dilations=tuple(dilations), seq_len=T, bblk=bblk, n_embed=n_embed)

    in_specs = [pl.BlockSpec((bblk * T, F), lambda i: (i, 0))]
    for p in (*conv_ws, l1w, l2w, pvec):
        # Full-array blocks with a constant index map: resident across grid
        # steps, single DMA each (the tiny per-channel params are already
        # packed into one slab).
        in_specs.append(pl.BlockSpec(p.shape, _const_index_map(p.ndim)))

    out = pl.pallas_call(
        kern,
        grid=(n_steps,),
        out_shape=jax.ShapeDtypeStruct((n_steps, bblk, n_embed), jnp.float32),
        in_specs=in_specs,
        out_specs=pl.BlockSpec((1, bblk, n_embed), lambda i: (i, 0, 0)),
        compiler_params=pltpu.CompilerParams(
            dimension_semantics=("parallel",)),   # v7x: one step per TC
    )(x2, *conv_ws, l1w, l2w, pvec)
    return out.reshape(B, n_embed)


# ------------------------- parameter initialization ------------------------

class _Rng:
    def __init__(self, key):
        self.key = key

    def next(self):
        self.key, k = jax.random.split(self.key)
        return k


def _normal(rng, shape, scale=0.1):
    return scale * jax.random.normal(rng.next(), shape, jnp.float32)


def _folded_bn(rng, c):
    gamma = 1.0 + 0.1 * jax.random.normal(rng.next(), (c,), jnp.float32)
    beta = 0.1 * jax.random.normal(rng.next(), (c,), jnp.float32)
    mean = 0.1 * jax.random.normal(rng.next(), (c,), jnp.float32)
    var = 0.5 + jax.random.uniform(rng.next(), (c,), dtype=jnp.float32)
    scale = gamma / jnp.sqrt(var + BN_EPS)
    shift = beta - mean * scale
    return scale, shift


def init_params(key, n_mels, channels, kernels, n_embed):
    rng = _Rng(key)
    lane = max(max(channels), n_embed)

    def pad(v):
        return jnp.pad(v, (0, lane - v.shape[0]))

    conv_ws = []
    rows = []
    cin = n_mels
    for cout, k in zip(channels, kernels):
        # Conv1d weight stored as (K, Cin, Cout): each tap is a ready-made
        # (Cin, Cout) matmul operand; bf16 for the MXU fast path.
        conv_ws.append(_normal(rng, (k, cin, cout)).astype(jnp.bfloat16))
        b = _normal(rng, (cout,))
        sc, sh = _folded_bn(rng, cout)
        rows += [pad(b), pad(sc), pad(sh)]
        cin = cout

    l1w = _normal(rng, (2 * cin, n_embed))          # f32 (tiny head weights)
    l2w = _normal(rng, (n_embed, n_embed))
    l1b = _normal(rng, (n_embed,))
    l1sc, l1sh = _folded_bn(rng, n_embed)
    l2b = _normal(rng, (n_embed,))
    l2sc, l2sh = _folded_bn(rng, n_embed)
    rows += [pad(l1b), pad(l1sc), pad(l1sh), pad(l2b), pad(l2sc), pad(l2sh)]

    n_pad = (-len(rows)) % 8                        # pad rows to sublane tile
    rows += [jnp.zeros((lane,), jnp.float32)] * n_pad
    pvec = jnp.stack(rows, axis=0)                  # single f32 param slab
    return conv_ws, l1w, l2w, pvec


# ------------------------ pure-JAX reference (check) ------------------------

def xvector_reference(x, conv_ws, l1w, l2w, pvec, *, channels, kernels,
                      dilations, n_embed):
    h = x.astype(jnp.float32)                       # (B, T, F)
    for i, (cout, k, d) in enumerate(zip(channels, kernels, dilations)):
        w = conv_ws[i]
        hb = h.astype(jnp.bfloat16)
        t_out = h.shape[1] - (k - 1) * d
        acc = jnp.zeros((h.shape[0], t_out, cout), jnp.float32)
        for kk in range(k):
            a = hb[:, kk * d:kk * d + t_out, :]
            acc = acc + jnp.einsum('btc,cd->btd', a, w[kk],
                                   preferred_element_type=jnp.float32)
        r = 3 * i
        z = acc + pvec[r, :cout]
        a = jnp.where(z >= 0, z, LEAKY_SLOPE * z)
        h = a * pvec[r + 1, :cout] + pvec[r + 2, :cout]
    mean = jnp.mean(h, axis=1)
    var = jnp.sum((h - mean[:, None, :]) ** 2, axis=1) / (h.shape[1] - 1)
    std = jnp.sqrt(var + STD_EPS)
    c = channels[-1]
    base = 3 * len(channels)
    z = mean @ l1w[:c] + std @ l1w[c:] + pvec[base, :n_embed]
    a = jnp.where(z >= 0, z, LEAKY_SLOPE * z)
    e = a * pvec[base + 1, :n_embed] + pvec[base + 2, :n_embed]
    z = e @ l2w + pvec[base + 3, :n_embed]
    a = jnp.where(z >= 0, z, LEAKY_SLOPE * z)
    return a * pvec[base + 4, :n_embed] + pvec[base + 5, :n_embed]


# ----------------------------------- main -----------------------------------

if __name__ == "__main__":
    key = jax.random.PRNGKey(0)
    pkey, xkey = jax.random.split(key)

    # Small x-vector config (per-block channels / kernel / dilation lists,
    # valid convs over time, n_embed embedding size).
    B, T, n_mels = 4, 32, 24
    channels = (64, 64, 64, 64, 128)
    kernels = (5, 3, 3, 1, 1)
    dilations = (1, 2, 3, 1, 1)
    n_embed = 32
    # valid time length shrinks 32 -> 28 -> 24 -> 18 -> 18 -> 18

    conv_ws, l1w, l2w, pvec = init_params(pkey, n_mels, channels, kernels,
                                          n_embed)
    x = jax.random.normal(xkey, (B, T, n_mels), jnp.float32)

    fwd = jax.jit(functools.partial(xvector_forward, channels=channels,
                                    kernels=kernels, dilations=dilations,
                                    n_embed=n_embed))
    out = jax.block_until_ready(fwd(x, conv_ws, l1w, l2w, pvec))
    assert out.shape == (B, n_embed), out.shape
    assert bool(jnp.all(jnp.isfinite(out)))

    ref = xvector_reference(x, conv_ws, l1w, l2w, pvec, channels=channels,
                            kernels=kernels, dilations=dilations,
                            n_embed=n_embed)
    np.testing.assert_allclose(np.asarray(out), np.asarray(ref),
                               rtol=2e-2, atol=2e-2)
    print("KERNEL_OK")
</pallas_src>

<mosaic_0001>
module attributes {stable_mosaic.version = 11 : i64} {
  func.func @xvector_kernel(%arg0: i32, %arg1: memref<64x24xf32, #tpu.memory_space<vmem>>, %arg2: memref<5x24x64xbf16, #tpu.memory_space<vmem>>, %arg3: memref<3x64x64xbf16, #tpu.memory_space<vmem>>, %arg4: memref<3x64x64xbf16, #tpu.memory_space<vmem>>, %arg5: memref<1x64x64xbf16, #tpu.memory_space<vmem>>, %arg6: memref<1x64x128xbf16, #tpu.memory_space<vmem>>, %arg7: memref<256x32xf32, #tpu.memory_space<vmem>>, %arg8: memref<32x32xf32, #tpu.memory_space<vmem>>, %arg9: memref<24x128xf32, #tpu.memory_space<vmem>>, %arg10: memref<1x2x32xf32, #tpu.memory_space<vmem>>) attributes {dimension_semantics = [#tpu.dimension_semantics<parallel>], iteration_bounds = array<i64: 2>, scalar_prefetch = 0 : i64, scratch_operands = 0 : i64, tpu.core_type = #tpu.core_type<tc>, window_params = [{transform_indices = @transform_0, window_bounds = array<i64: 64, 24>}, {pipeline_mode = #tpu.pipeline_mode<synchronous>, transform_indices = @transform_1, window_bounds = array<i64: 5, 24, 64>}, {pipeline_mode = #tpu.pipeline_mode<synchronous>, transform_indices = @transform_2, window_bounds = array<i64: 3, 64, 64>}, {pipeline_mode = #tpu.pipeline_mode<synchronous>, transform_indices = @transform_3, window_bounds = array<i64: 3, 64, 64>}, {pipeline_mode = #tpu.pipeline_mode<synchronous>, transform_indices = @transform_4, window_bounds = array<i64: 1, 64, 64>}, {pipeline_mode = #tpu.pipeline_mode<synchronous>, transform_indices = @transform_5, window_bounds = array<i64: 1, 64, 128>}, {pipeline_mode = #tpu.pipeline_mode<synchronous>, transform_indices = @transform_6, window_bounds = array<i64: 256, 32>}, {pipeline_mode = #tpu.pipeline_mode<synchronous>, transform_indices = @transform_7, window_bounds = array<i64: 32, 32>}, {pipeline_mode = #tpu.pipeline_mode<synchronous>, transform_indices = @transform_8, window_bounds = array<i64: 24, 128>}, {transform_indices = @transform_9, window_bounds = array<i64: 1, 2, 32>}]} {
    %c0 = arith.constant 0 : index
    %c0_0 = arith.constant 0 : index
    %0 = vector.load %arg1[%c0, %c0_0] : memref<64x24xf32, #tpu.memory_space<vmem>>, vector<64x24xf32>
    %1 = arith.truncf %0 : vector<64x24xf32> to vector<64x24xbf16>
    %c0_1 = arith.constant 0 : index
    %c0_2 = arith.constant 0 : index
    %c0_3 = arith.constant 0 : index
    %2 = vector.load %arg2[%c0_1, %c0_2, %c0_3] : memref<5x24x64xbf16, #tpu.memory_space<vmem>>, vector<1x24x64xbf16>
    %3 = vector.shape_cast %2 : vector<1x24x64xbf16> to vector<24x64xbf16>
    %cst = arith.constant dense<0.000000e+00> : vector<64x64xf32>
    %4 = tpu.matmul %1, %3, %cst {dimension_numbers = #tpu.dot_dimension_numbers<[1], [0], [0], [1], [0, 0, 1, 1], [], []>} : vector<64x24xbf16>, vector<24x64xbf16>, vector<64x64xf32> -> vector<64x64xf32>
    %c1 = arith.constant 1 : index
    %c0_4 = arith.constant 0 : index
    %c0_5 = arith.constant 0 : index
    %5 = vector.load %arg2[%c1, %c0_4, %c0_5] : memref<5x24x64xbf16, #tpu.memory_space<vmem>>, vector<1x24x64xbf16>
    %6 = vector.shape_cast %5 : vector<1x24x64xbf16> to vector<24x64xbf16>
    %cst_6 = arith.constant dense<0.000000e+00> : vector<64x64xf32>
    %7 = tpu.matmul %1, %6, %cst_6 {dimension_numbers = #tpu.dot_dimension_numbers<[1], [0], [0], [1], [0, 0, 1, 1], [], []>} : vector<64x24xbf16>, vector<24x64xbf16>, vector<64x64xf32> -> vector<64x64xf32>
    %c63_i32 = arith.constant 63 : i32
    %8 = tpu.dynamic_rotate %7 by %c63_i32 dim 0 : vector<64x64xf32>, i32 -> vector<64x64xf32>
    %9 = arith.addf %4, %8 : vector<64x64xf32>
    %c2 = arith.constant 2 : index
    %c0_7 = arith.constant 0 : index
    %c0_8 = arith.constant 0 : index
    %10 = vector.load %arg2[%c2, %c0_7, %c0_8] : memref<5x24x64xbf16, #tpu.memory_space<vmem>>, vector<1x24x64xbf16>
    %11 = vector.shape_cast %10 : vector<1x24x64xbf16> to vector<24x64xbf16>
    %cst_9 = arith.constant dense<0.000000e+00> : vector<64x64xf32>
    %12 = tpu.matmul %1, %11, %cst_9 {dimension_numbers = #tpu.dot_dimension_numbers<[1], [0], [0], [1], [0, 0, 1, 1], [], []>} : vector<64x24xbf16>, vector<24x64xbf16>, vector<64x64xf32> -> vector<64x64xf32>
    %c62_i32 = arith.constant 62 : i32
    %13 = tpu.dynamic_rotate %12 by %c62_i32 dim 0 : vector<64x64xf32>, i32 -> vector<64x64xf32>
    %14 = arith.addf %9, %13 : vector<64x64xf32>
    %c3 = arith.constant 3 : index
    %c0_10 = arith.constant 0 : index
    %c0_11 = arith.constant 0 : index
    %15 = vector.load %arg2[%c3, %c0_10, %c0_11] : memref<5x24x64xbf16, #tpu.memory_space<vmem>>, vector<1x24x64xbf16>
    %16 = vector.shape_cast %15 : vector<1x24x64xbf16> to vector<24x64xbf16>
    %cst_12 = arith.constant dense<0.000000e+00> : vector<64x64xf32>
    %17 = tpu.matmul %1, %16, %cst_12 {dimension_numbers = #tpu.dot_dimension_numbers<[1], [0], [0], [1], [0, 0, 1, 1], [], []>} : vector<64x24xbf16>, vector<24x64xbf16>, vector<64x64xf32> -> vector<64x64xf32>
    %c61_i32 = arith.constant 61 : i32
    %18 = tpu.dynamic_rotate %17 by %c61_i32 dim 0 : vector<64x64xf32>, i32 -> vector<64x64xf32>
    %19 = arith.addf %14, %18 : vector<64x64xf32>
    %c4 = arith.constant 4 : index
    %c0_13 = arith.constant 0 : index
    %c0_14 = arith.constant 0 : index
    %20 = vector.load %arg2[%c4, %c0_13, %c0_14] : memref<5x24x64xbf16, #tpu.memory_space<vmem>>, vector<1x24x64xbf16>
    %21 = vector.shape_cast %20 : vector<1x24x64xbf16> to vector<24x64xbf16>
    %cst_15 = arith.constant dense<0.000000e+00> : vector<64x64xf32>
    %22 = tpu.matmul %1, %21, %cst_15 {dimension_numbers = #tpu.dot_dimension_numbers<[1], [0], [0], [1], [0, 0, 1, 1], [], []>} : vector<64x24xbf16>, vector<24x64xbf16>, vector<64x64xf32> -> vector<64x64xf32>
    %c60_i32 = arith.constant 60 : i32
    %23 = tpu.dynamic_rotate %22 by %c60_i32 dim 0 : vector<64x64xf32>, i32 -> vector<64x64xf32>
    %24 = arith.addf %19, %23 : vector<64x64xf32>
    %c0_16 = arith.constant 0 : index
    %c0_17 = arith.constant 0 : index
    %25 = vector.load %arg9[%c0_16, %c0_17] : memref<24x128xf32, #tpu.memory_space<vmem>>, vector<1x64xf32>
    %c1_18 = arith.constant 1 : index
    %c0_19 = arith.constant 0 : index
    %26 = vector.load %arg9[%c1_18, %c0_19] : memref<24x128xf32, #tpu.memory_space<vmem>>, vector<1x64xf32>
    %c2_20 = arith.constant 2 : index
    %c0_21 = arith.constant 0 : index
    %27 = vector.load %arg9[%c2_20, %c0_21] : memref<24x128xf32, #tpu.memory_space<vmem>>, vector<1x64xf32>
    %28 = vector.broadcast %25 : vector<1x64xf32> to vector<64x64xf32>
    %29 = arith.addf %24, %28 : vector<64x64xf32>
    %cst_22 = arith.constant 0.000000e+00 : f32
    %30 = vector.broadcast %cst_22 : f32 to vector<64x64xf32>
    %31 = arith.cmpf oge, %29, %30 : vector<64x64xf32>
    %cst_23 = arith.constant 0.00999999977 : f32
    %32 = vector.broadcast %cst_23 : f32 to vector<1x64xf32>
    %33 = arith.mulf %32, %26 : vector<1x64xf32>
    %34 = vector.shape_cast %26 : vector<1x64xf32> to vector<1x64xf32>
    %35 = vector.broadcast %34 : vector<1x64xf32> to vector<64x64xf32>
    %36 = vector.shape_cast %33 : vector<1x64xf32> to vector<1x64xf32>
    %37 = vector.broadcast %36 : vector<1x64xf32> to vector<64x64xf32>
    %38 = arith.select %31, %35, %37 : vector<64x64xi1>, vector<64x64xf32>
    %39 = arith.mulf %29, %38 : vector<64x64xf32>
    %40 = vector.broadcast %27 : vector<1x64xf32> to vector<64x64xf32>
    %41 = arith.addf %39, %40 : vector<64x64xf32>
    %42 = arith.truncf %41 : vector<64x64xf32> to vector<64x64xbf16>
    %c0_24 = arith.constant 0 : index
    %c0_25 = arith.constant 0 : index
    %c0_26 = arith.constant 0 : index
    %43 = vector.load %arg3[%c0_24, %c0_25, %c0_26] : memref<3x64x64xbf16, #tpu.memory_space<vmem>>, vector<1x64x64xbf16>
    %44 = vector.shape_cast %43 : vector<1x64x64xbf16> to vector<64x64xbf16>
    %cst_27 = arith.constant dense<0.000000e+00> : vector<64x64xf32>
    %45 = tpu.matmul %42, %44, %cst_27 {dimension_numbers = #tpu.dot_dimension_numbers<[1], [0], [0], [1], [0, 0, 1, 1], [], []>} : vector<64x64xbf16>, vector<64x64xbf16>, vector<64x64xf32> -> vector<64x64xf32>
    %c1_28 = arith.constant 1 : index
    %c0_29 = arith.constant 0 : index
    %c0_30 = arith.constant 0 : index
    %46 = vector.load %arg3[%c1_28, %c0_29, %c0_30] : memref<3x64x64xbf16, #tpu.memory_space<vmem>>, vector<1x64x64xbf16>
    %47 = vector.shape_cast %46 : vector<1x64x64xbf16> to vector<64x64xbf16>
    %cst_31 = arith.constant dense<0.000000e+00> : vector<64x64xf32>
    %48 = tpu.matmul %42, %47, %cst_31 {dimension_numbers = #tpu.dot_dimension_numbers<[1], [0], [0], [1], [0, 0, 1, 1], [], []>} : vector<64x64xbf16>, vector<64x64xbf16>, vector<64x64xf32> -> vector<64x64xf32>
    %c62_i32_32 = arith.constant 62 : i32
    %49 = tpu.dynamic_rotate %48 by %c62_i32_32 dim 0 : vector<64x64xf32>, i32 -> vector<64x64xf32>
    %50 = arith.addf %45, %49 : vector<64x64xf32>
    %c2_33 = arith.constant 2 : index
    %c0_34 = arith.constant 0 : index
    %c0_35 = arith.constant 0 : index
    %51 = vector.load %arg3[%c2_33, %c0_34, %c0_35] : memref<3x64x64xbf16, #tpu.memory_space<vmem>>, vector<1x64x64xbf16>
    %52 = vector.shape_cast %51 : vector<1x64x64xbf16> to vector<64x64xbf16>
    %cst_36 = arith.constant dense<0.000000e+00> : vector<64x64xf32>
    %53 = tpu.matmul %42, %52, %cst_36 {dimension_numbers = #tpu.dot_dimension_numbers<[1], [0], [0], [1], [0, 0, 1, 1], [], []>} : vector<64x64xbf16>, vector<64x64xbf16>, vector<64x64xf32> -> vector<64x64xf32>
    %c60_i32_37 = arith.constant 60 : i32
    %54 = tpu.dynamic_rotate %53 by %c60_i32_37 dim 0 : vector<64x64xf32>, i32 -> vector<64x64xf32>
    %55 = arith.addf %50, %54 : vector<64x64xf32>
    %c3_38 = arith.constant 3 : index
    %c0_39 = arith.constant 0 : index
    %56 = vector.load %arg9[%c3_38, %c0_39] : memref<24x128xf32, #tpu.memory_space<vmem>>, vector<1x64xf32>
    %c4_40 = arith.constant 4 : index
    %c0_41 = arith.constant 0 : index
    %57 = vector.load %arg9[%c4_40, %c0_41] : memref<24x128xf32, #tpu.memory_space<vmem>>, vector<1x64xf32>
    %c5 = arith.constant 5 : index
    %c0_42 = arith.constant 0 : index
    %58 = vector.load %arg9[%c5, %c0_42] : memref<24x128xf32, #tpu.memory_space<vmem>>, vector<1x64xf32>
    %59 = vector.broadcast %56 : vector<1x64xf32> to vector<64x64xf32>
    %60 = arith.addf %55, %59 : vector<64x64xf32>
    %cst_43 = arith.constant 0.000000e+00 : f32
    %61 = vector.broadcast %cst_43 : f32 to vector<64x64xf32>
    %62 = arith.cmpf oge, %60, %61 : vector<64x64xf32>
    %cst_44 = arith.constant 0.00999999977 : f32
    %63 = vector.broadcast %cst_44 : f32 to vector<1x64xf32>
    %64 = arith.mulf %63, %57 : vector<1x64xf32>
    %65 = vector.shape_cast %57 : vector<1x64xf32> to vector<1x64xf32>
    %66 = vector.broadcast %65 : vector<1x64xf32> to vector<64x64xf32>
    %67 = vector.shape_cast %64 : vector<1x64xf32> to vector<1x64xf32>
    %68 = vector.broadcast %67 : vector<1x64xf32> to vector<64x64xf32>
    %69 = arith.select %62, %66, %68 : vector<64x64xi1>, vector<64x64xf32>
    %70 = arith.mulf %60, %69 : vector<64x64xf32>
    %71 = vector.broadcast %58 : vector<1x64xf32> to vector<64x64xf32>
    %72 = arith.addf %70, %71 : vector<64x64xf32>
    %73 = arith.truncf %72 : vector<64x64xf32> to vector<64x64xbf16>
    %c0_45 = arith.constant 0 : index
    %c0_46 = arith.constant 0 : index
    %c0_47 = arith.constant 0 : index
    %74 = vector.load %arg4[%c0_45, %c0_46, %c0_47] : memref<3x64x64xbf16, #tpu.memory_space<vmem>>, vector<1x64x64xbf16>
    %75 = vector.shape_cast %74 : vector<1x64x64xbf16> to vector<64x64xbf16>
    %cst_48 = arith.constant dense<0.000000e+00> : vector<64x64xf32>
    %76 = tpu.matmul %73, %75, %cst_48 {dimension_numbers = #tpu.dot_dimension_numbers<[1], [0], [0], [1], [0, 0, 1, 1], [], []>} : vector<64x64xbf16>, vector<64x64xbf16>, vector<64x64xf32> -> vector<64x64xf32>
    %c1_49 = arith.constant 1 : index
    %c0_50 = arith.constant 0 : index
    %c0_51 = arith.constant 0 : index
    %77 = vector.load %arg4[%c1_49, %c0_50, %c0_51] : memref<3x64x64xbf16, #tpu.memory_space<vmem>>, vector<1x64x64xbf16>
    %78 = vector.shape_cast %77 : vector<1x64x64xbf16> to vector<64x64xbf16>
    %cst_52 = arith.constant dense<0.000000e+00> : vector<64x64xf32>
    %79 = tpu.matmul %73, %78, %cst_52 {dimension_numbers = #tpu.dot_dimension_numbers<[1], [0], [0], [1], [0, 0, 1, 1], [], []>} : vector<64x64xbf16>, vector<64x64xbf16>, vector<64x64xf32> -> vector<64x64xf32>
    %c61_i32_53 = arith.constant 61 : i32
    %80 = tpu.dynamic_rotate %79 by %c61_i32_53 dim 0 : vector<64x64xf32>, i32 -> vector<64x64xf32>
    %81 = arith.addf %76, %80 : vector<64x64xf32>
    %c2_54 = arith.constant 2 : index
    %c0_55 = arith.constant 0 : index
    %c0_56 = arith.constant 0 : index
    %82 = vector.load %arg4[%c2_54, %c0_55, %c0_56] : memref<3x64x64xbf16, #tpu.memory_space<vmem>>, vector<1x64x64xbf16>
    %83 = vector.shape_cast %82 : vector<1x64x64xbf16> to vector<64x64xbf16>
    %cst_57 = arith.constant dense<0.000000e+00> : vector<64x64xf32>
    %84 = tpu.matmul %73, %83, %cst_57 {dimension_numbers = #tpu.dot_dimension_numbers<[1], [0], [0], [1], [0, 0, 1, 1], [], []>} : vector<64x64xbf16>, vector<64x64xbf16>, vector<64x64xf32> -> vector<64x64xf32>
    %c58_i32 = arith.constant 58 : i32
    %85 = tpu.dynamic_rotate %84 by %c58_i32 dim 0 : vector<64x64xf32>, i32 -> vector<64x64xf32>
    %86 = arith.addf %81, %85 : vector<64x64xf32>
    %c6 = arith.constant 6 : index
    %c0_58 = arith.constant 0 : index
    %87 = vector.load %arg9[%c6, %c0_58] : memref<24x128xf32, #tpu.memory_space<vmem>>, vector<1x64xf32>
    %c7 = arith.constant 7 : index
    %c0_59 = arith.constant 0 : index
    %88 = vector.load %arg9[%c7, %c0_59] : memref<24x128xf32, #tpu.memory_space<vmem>>, vector<1x64xf32>
    %c8 = arith.constant 8 : index
    %c0_60 = arith.constant 0 : index
    %89 = vector.load %arg9[%c8, %c0_60] : memref<24x128xf32, #tpu.memory_space<vmem>>, vector<1x64xf32>
    %90 = vector.broadcast %87 : vector<1x64xf32> to vector<64x64xf32>
    %91 = arith.addf %86, %90 : vector<64x64xf32>
    %cst_61 = arith.constant 0.000000e+00 : f32
    %92 = vector.broadcast %cst_61 : f32 to vector<64x64xf32>
    %93 = arith.cmpf oge, %91, %92 : vector<64x64xf32>
    %cst_62 = arith.constant 0.00999999977 : f32
    %94 = vector.broadcast %cst_62 : f32 to vector<1x64xf32>
    %95 = arith.mulf %94, %88 : vector<1x64xf32>
    %96 = vector.shape_cast %88 : vector<1x64xf32> to vector<1x64xf32>
    %97 = vector.broadcast %96 : vector<1x64xf32> to vector<64x64xf32>
    %98 = vector.shape_cast %95 : vector<1x64xf32> to vector<1x64xf32>
    %99 = vector.broadcast %98 : vector<1x64xf32> to vector<64x64xf32>
    %100 = arith.select %93, %97, %99 : vector<64x64xi1>, vector<64x64xf32>
    %101 = arith.mulf %91, %100 : vector<64x64xf32>
    %102 = vector.broadcast %89 : vector<1x64xf32> to vector<64x64xf32>
    %103 = arith.addf %101, %102 : vector<64x64xf32>
    %104 = arith.truncf %103 : vector<64x64xf32> to vector<64x64xbf16>
    %c0_63 = arith.constant 0 : index
    %c0_64 = arith.constant 0 : index
    %c0_65 = arith.constant 0 : index
    %105 = vector.load %arg5[%c0_63, %c0_64, %c0_65] : memref<1x64x64xbf16, #tpu.memory_space<vmem>>, vector<1x64x64xbf16>
    %106 = vector.shape_cast %105 : vector<1x64x64xbf16> to vector<64x64xbf16>
    %cst_66 = arith.constant dense<0.000000e+00> : vector<64x64xf32>
    %107 = tpu.matmul %104, %106, %cst_66 {dimension_numbers = #tpu.dot_dimension_numbers<[1], [0], [0], [1], [0, 0, 1, 1], [], []>} : vector<64x64xbf16>, vector<64x64xbf16>, vector<64x64xf32> -> vector<64x64xf32>
    %c9 = arith.constant 9 : index
    %c0_67 = arith.constant 0 : index
    %108 = vector.load %arg9[%c9, %c0_67] : memref<24x128xf32, #tpu.memory_space<vmem>>, vector<1x64xf32>
    %c10 = arith.constant 10 : index
    %c0_68 = arith.constant 0 : index
    %109 = vector.load %arg9[%c10, %c0_68] : memref<24x128xf32, #tpu.memory_space<vmem>>, vector<1x64xf32>
    %c11 = arith.constant 11 : index
    %c0_69 = arith.constant 0 : index
    %110 = vector.load %arg9[%c11, %c0_69] : memref<24x128xf32, #tpu.memory_space<vmem>>, vector<1x64xf32>
    %111 = vector.broadcast %108 : vector<1x64xf32> to vector<64x64xf32>
    %112 = arith.addf %107, %111 : vector<64x64xf32>
    %cst_70 = arith.constant 0.000000e+00 : f32
    %113 = vector.broadcast %cst_70 : f32 to vector<64x64xf32>
    %114 = arith.cmpf oge, %112, %113 : vector<64x64xf32>
    %cst_71 = arith.constant 0.00999999977 : f32
    %115 = vector.broadcast %cst_71 : f32 to vector<1x64xf32>
    %116 = arith.mulf %115, %109 : vector<1x64xf32>
    %117 = vector.shape_cast %109 : vector<1x64xf32> to vector<1x64xf32>
    %118 = vector.broadcast %117 : vector<1x64xf32> to vector<64x64xf32>
    %119 = vector.shape_cast %116 : vector<1x64xf32> to vector<1x64xf32>
    %120 = vector.broadcast %119 : vector<1x64xf32> to vector<64x64xf32>
    %121 = arith.select %114, %118, %120 : vector<64x64xi1>, vector<64x64xf32>
    %122 = arith.mulf %112, %121 : vector<64x64xf32>
    %123 = vector.broadcast %110 : vector<1x64xf32> to vector<64x64xf32>
    %124 = arith.addf %122, %123 : vector<64x64xf32>
    %125 = arith.truncf %124 : vector<64x64xf32> to vector<64x64xbf16>
    %c0_72 = arith.constant 0 : index
    %c0_73 = arith.constant 0 : index
    %c0_74 = arith.constant 0 : index
    %126 = vector.load %arg6[%c0_72, %c0_73, %c0_74] : memref<1x64x128xbf16, #tpu.memory_space<vmem>>, vector<1x64x128xbf16>
    %127 = vector.shape_cast %126 : vector<1x64x128xbf16> to vector<64x128xbf16>
    %cst_75 = arith.constant dense<0.000000e+00> : vector<64x128xf32>
    %128 = tpu.matmul %125, %127, %cst_75 {dimension_numbers = #tpu.dot_dimension_numbers<[1], [0], [0], [1], [0, 0, 1, 1], [], []>} : vector<64x64xbf16>, vector<64x128xbf16>, vector<64x128xf32> -> vector<64x128xf32>
    %c12 = arith.constant 12 : index
    %c0_76 = arith.constant 0 : index
    %129 = vector.load %arg9[%c12, %c0_76] : memref<24x128xf32, #tpu.memory_space<vmem>>, vector<1x128xf32>
    %c13 = arith.constant 13 : index
    %c0_77 = arith.constant 0 : index
    %130 = vector.load %arg9[%c13, %c0_77] : memref<24x128xf32, #tpu.memory_space<vmem>>, vector<1x128xf32>
    %c14 = arith.constant 14 : index
    %c0_78 = arith.constant 0 : index
    %131 = vector.load %arg9[%c14, %c0_78] : memref<24x128xf32, #tpu.memory_space<vmem>>, vector<1x128xf32>
    %132 = vector.broadcast %129 : vector<1x128xf32> to vector<64x128xf32>
    %133 = arith.addf %128, %132 : vector<64x128xf32>
    %cst_79 = arith.constant 0.000000e+00 : f32
    %134 = vector.broadcast %cst_79 : f32 to vector<64x128xf32>
    %135 = arith.cmpf oge, %133, %134 : vector<64x128xf32>
    %cst_80 = arith.constant 0.00999999977 : f32
    %136 = vector.broadcast %cst_80 : f32 to vector<1x128xf32>
    %137 = arith.mulf %136, %130 : vector<1x128xf32>
    %138 = vector.shape_cast %130 : vector<1x128xf32> to vector<1x128xf32>
    %139 = vector.broadcast %138 : vector<1x128xf32> to vector<64x128xf32>
    %140 = vector.shape_cast %137 : vector<1x128xf32> to vector<1x128xf32>
    %141 = vector.broadcast %140 : vector<1x128xf32> to vector<64x128xf32>
    %142 = arith.select %135, %139, %141 : vector<64x128xi1>, vector<64x128xf32>
    %143 = arith.mulf %133, %142 : vector<64x128xf32>
    %144 = vector.broadcast %131 : vector<1x128xf32> to vector<64x128xf32>
    %145 = arith.addf %143, %144 : vector<64x128xf32>
    %146 = tpu.iota {dimensions = array<i32: 1>} : vector<2x64xi32>
    %147 = tpu.iota {dimensions = array<i32: 0>} : vector<2x64xi32>
    %c32_i32 = arith.constant 32 : i32
    %148 = vector.broadcast %c32_i32 : i32 to vector<2x64xi32>
    %149 = arith.muli %147, %148 : vector<2x64xi32>
    %150 = arith.cmpi sge, %146, %149 : vector<2x64xi32>
    %c18_i32 = arith.constant 18 : i32
    %151 = vector.broadcast %c18_i32 : i32 to vector<2x64xi32>
    %152 = arith.addi %149, %151 : vector<2x64xi32>
    %153 = arith.cmpi slt, %146, %152 : vector<2x64xi32>
    %154 = arith.andi %150, %153 : vector<2x64xi1>
    %155 = arith.extui %154 : vector<2x64xi1> to vector<2x64xi32>
    %156 = arith.sitofp %155 : vector<2x64xi32> to vector<2x64xf32>
    %cst_81 = arith.constant dense<0.000000e+00> : vector<2x128xf32>
    %157 = tpu.matmul %156, %145, %cst_81 {dimension_numbers = #tpu.dot_dimension_numbers<[1], [0], [0], [1], [0, 0, 1, 1], [], []>} : vector<2x64xf32>, vector<64x128xf32>, vector<2x128xf32> -> vector<2x128xf32>
    %158 = arith.mulf %145, %145 : vector<64x128xf32>
    %cst_82 = arith.constant dense<0.000000e+00> : vector<2x128xf32>
    %159 = tpu.matmul %156, %158, %cst_82 {dimension_numbers = #tpu.dot_dimension_numbers<[1], [0], [0], [1], [0, 0, 1, 1], [], []>} : vector<2x64xf32>, vector<64x128xf32>, vector<2x128xf32> -> vector<2x128xf32>
    %cst_83 = arith.constant 0.055555556 : f32
    %160 = vector.broadcast %cst_83 : f32 to vector<2x128xf32>
    %161 = arith.mulf %157, %160 : vector<2x128xf32>
    %cst_84 = arith.constant 1.800000e+01 : f32
    %162 = vector.broadcast %cst_84 : f32 to vector<2x128xf32>
    %163 = arith.mulf %162, %161 : vector<2x128xf32>
    %164 = arith.mulf %163, %161 : vector<2x128xf32>
    %165 = arith.subf %159, %164 : vector<2x128xf32>
    %cst_85 = arith.constant 0.0588235296 : f32
    %166 = vector.broadcast %cst_85 : f32 to vector<2x128xf32>
    %167 = arith.mulf %165, %166 : vector<2x128xf32>
    %cst_86 = arith.constant 0.000000e+00 : f32
    %168 = vector.broadcast %cst_86 : f32 to vector<2x128xf32>
    %169 = arith.maximumf %167, %168 : vector<2x128xf32>
    %cst_87 = arith.constant 9.99999993E-9 : f32
    %170 = vector.broadcast %cst_87 : f32 to vector<2x128xf32>
    %171 = arith.addf %169, %170 : vector<2x128xf32>
    %172 = math.sqrt %171 : vector<2x128xf32>
    %c15 = arith.constant 15 : index
    %c0_88 = arith.constant 0 : index
    %173 = vector.load %arg9[%c15, %c0_88] : memref<24x128xf32, #tpu.memory_space<vmem>>, vector<1x32xf32>
    %c16 = arith.constant 16 : index
    %c0_89 = arith.constant 0 : index
    %174 = vector.load %arg9[%c16, %c0_89] : memref<24x128xf32, #tpu.memory_space<vmem>>, vector<1x32xf32>
    %c17 = arith.constant 17 : index
    %c0_90 = arith.constant 0 : index
    %175 = vector.load %arg9[%c17, %c0_90] : memref<24x128xf32, #tpu.memory_space<vmem>>, vector<1x32xf32>
    %c18 = arith.constant 18 : index
    %c0_91 = arith.constant 0 : index
    %176 = vector.load %arg9[%c18, %c0_91] : memref<24x128xf32, #tpu.memory_space<vmem>>, vector<1x32xf32>
    %c19 = arith.constant 19 : index
    %c0_92 = arith.constant 0 : index
    %177 = vector.load %arg9[%c19, %c0_92] : memref<24x128xf32, #tpu.memory_space<vmem>>, vector<1x32xf32>
    %c20 = arith.constant 20 : index
    %c0_93 = arith.constant 0 : index
    %178 = vector.load %arg9[%c20, %c0_93] : memref<24x128xf32, #tpu.memory_space<vmem>>, vector<1x32xf32>
    %c0_94 = arith.constant 0 : index
    %c0_95 = arith.constant 0 : index
    %179 = vector.load %arg7[%c0_94, %c0_95] : memref<256x32xf32, #tpu.memory_space<vmem>>, vector<128x32xf32>
    %cst_96 = arith.constant dense<0.000000e+00> : vector<2x32xf32>
    %180 = tpu.matmul %161, %179, %cst_96 {dimension_numbers = #tpu.dot_dimension_numbers<[1], [0], [0], [1], [0, 0, 1, 1], [], []>} : vector<2x128xf32>, vector<128x32xf32>, vector<2x32xf32> -> vector<2x32xf32>
    %c128 = arith.constant 128 : index
    %c0_97 = arith.constant 0 : index
    %181 = vector.load %arg7[%c128, %c0_97] : memref<256x32xf32, #tpu.memory_space<vmem>>, vector<128x32xf32>
    %cst_98 = arith.constant dense<0.000000e+00> : vector<2x32xf32>
    %182 = tpu.matmul %172, %181, %cst_98 {dimension_numbers = #tpu.dot_dimension_numbers<[1], [0], [0], [1], [0, 0, 1, 1], [], []>} : vector<2x128xf32>, vector<128x32xf32>, vector<2x32xf32> -> vector<2x32xf32>
    %183 = arith.addf %180, %182 : vector<2x32xf32>
    %184 = vector.broadcast %173 : vector<1x32xf32> to vector<2x32xf32>
    %185 = arith.addf %183, %184 : vector<2x32xf32>
    %cst_99 = arith.constant 0.000000e+00 : f32
    %186 = vector.broadcast %cst_99 : f32 to vector<2x32xf32>
    %187 = arith.cmpf oge, %185, %186 : vector<2x32xf32>
    %cst_100 = arith.constant 0.00999999977 : f32
    %188 = vector.broadcast %cst_100 : f32 to vector<1x32xf32>
    %189 = arith.mulf %188, %174 : vector<1x32xf32>
    %190 = vector.shape_cast %174 : vector<1x32xf32> to vector<1x32xf32>
    %191 = vector.broadcast %190 : vector<1x32xf32> to vector<2x32xf32>
    %192 = vector.shape_cast %189 : vector<1x32xf32> to vector<1x32xf32>
    %193 = vector.broadcast %192 : vector<1x32xf32> to vector<2x32xf32>
    %194 = arith.select %187, %191, %193 : vector<2x32xi1>, vector<2x32xf32>
    %195 = arith.mulf %185, %194 : vector<2x32xf32>
    %196 = vector.broadcast %175 : vector<1x32xf32> to vector<2x32xf32>
    %197 = arith.addf %195, %196 : vector<2x32xf32>
    %c0_101 = arith.constant 0 : index
    %c0_102 = arith.constant 0 : index
    %198 = vector.load %arg8[%c0_101, %c0_102] : memref<32x32xf32, #tpu.memory_space<vmem>>, vector<32x32xf32>
    %cst_103 = arith.constant dense<0.000000e+00> : vector<2x32xf32>
    %199 = tpu.matmul %197, %198, %cst_103 {dimension_numbers = #tpu.dot_dimension_numbers<[1], [0], [0], [1], [0, 0, 1, 1], [], []>} : vector<2x32xf32>, vector<32x32xf32>, vector<2x32xf32> -> vector<2x32xf32>
    %200 = vector.broadcast %176 : vector<1x32xf32> to vector<2x32xf32>
    %201 = arith.addf %199, %200 : vector<2x32xf32>
    %cst_104 = arith.constant 0.000000e+00 : f32
    %202 = vector.broadcast %cst_104 : f32 to vector<2x32xf32>
    %203 = arith.cmpf oge, %201, %202 : vector<2x32xf32>
    %cst_105 = arith.constant 0.00999999977 : f32
    %204 = vector.broadcast %cst_105 : f32 to vector<1x32xf32>
    %205 = arith.mulf %204, %177 : vector<1x32xf32>
    %206 = vector.shape_cast %177 : vector<1x32xf32> to vector<1x32xf32>
    %207 = vector.broadcast %206 : vector<1x32xf32> to vector<2x32xf32>
    %208 = vector.shape_cast %205 : vector<1x32xf32> to vector<1x32xf32>
    %209 = vector.broadcast %208 : vector<1x32xf32> to vector<2x32xf32>
    %210 = arith.select %203, %207, %209 : vector<2x32xi1>, vector<2x32xf32>
    %211 = arith.mulf %201, %210 : vector<2x32xf32>
    %212 = vector.broadcast %178 : vector<1x32xf32> to vector<2x32xf32>
    %213 = arith.addf %211, %212 : vector<2x32xf32>
    %c0_106 = arith.constant 0 : index
    %c0_107 = arith.constant 0 : index
    %c0_108 = arith.constant 0 : index
    %214 = vector.load %arg10[%c0_106, %c0_107, %c0_108] : memref<1x2x32xf32, #tpu.memory_space<vmem>>, vector<1x2x32xf32>
    %215 = vector.shape_cast %214 : vector<1x2x32xf32> to vector<2x32xf32>
    %216 = vector.shape_cast %213 : vector<2x32xf32> to vector<1x2x32xf32>
    tpu.vector_store %arg10[%c0_106, %c0_107, %c0_108], %216 {strides = array<i32>} : memref<1x2x32xf32, #tpu.memory_space<vmem>>, vector<1x2x32xf32>,
    return
  }
  func.func @transform_0(%arg0: i32) -> (i32, i32) {
    %c0_i32 = arith.constant 0 : i32
    %c0_i32_0 = arith.constant 0 : i32
    return %arg0, %c0_i32 : i32, i32
  }
  func.func @transform_1(%arg0: i32) -> (i32, i32, i32) {
    %c0_i32 = arith.constant 0 : i32
    %c0_i32_0 = arith.constant 0 : i32
    %c0_i32_1 = arith.constant 0 : i32
    %c0_i32_2 = arith.constant 0 : i32
    return %c0_i32, %c0_i32_0, %c0_i32_1 : i32, i32, i32
  }
  func.func @transform_2(%arg0: i32) -> (i32, i32, i32) {
    %c0_i32 = arith.constant 0 : i32
    %c0_i32_0 = arith.constant 0 : i32
    %c0_i32_1 = arith.constant 0 : i32
    %c0_i32_2 = arith.constant 0 : i32
    return %c0_i32, %c0_i32_0, %c0_i32_1 : i32, i32, i32
  }
  func.func @transform_3(%arg0: i32) -> (i32, i32, i32) {
    %c0_i32 = arith.constant 0 : i32
    %c0_i32_0 = arith.constant 0 : i32
    %c0_i32_1 = arith.constant 0 : i32
    %c0_i32_2 = arith.constant 0 : i32
    return %c0_i32, %c0_i32_0, %c0_i32_1 : i32, i32, i32
  }
  func.func @transform_4(%arg0: i32) -> (i32, i32, i32) {
    %c0_i32 = arith.constant 0 : i32
    %c0_i32_0 = arith.constant 0 : i32
    %c0_i32_1 = arith.constant 0 : i32
    %c0_i32_2 = arith.constant 0 : i32
    return %c0_i32, %c0_i32_0, %c0_i32_1 : i32, i32, i32
  }
  func.func @transform_5(%arg0: i32) -> (i32, i32, i32) {
    %c0_i32 = arith.constant 0 : i32
    %c0_i32_0 = arith.constant 0 : i32
    %c0_i32_1 = arith.constant 0 : i32
    %c0_i32_2 = arith.constant 0 : i32
    return %c0_i32, %c0_i32_0, %c0_i32_1 : i32, i32, i32
  }
  func.func @transform_6(%arg0: i32) -> (i32, i32) {
    %c0_i32 = arith.constant 0 : i32
    %c0_i32_0 = arith.constant 0 : i32
    %c0_i32_1 = arith.constant 0 : i32
    return %c0_i32, %c0_i32_0 : i32, i32
  }
  func.func @transform_7(%arg0: i32) -> (i32, i32) {
    %c0_i32 = arith.constant 0 : i32
    %c0_i32_0 = arith.constant 0 : i32
    %c0_i32_1 = arith.constant 0 : i32
    return %c0_i32, %c0_i32_0 : i32, i32
  }
  func.func @transform_8(%arg0: i32) -> (i32, i32) {
    %c0_i32 = arith.constant 0 : i32
    %c0_i32_0 = arith.constant 0 : i32
    %c0_i32_1 = arith.constant 0 : i32
    return %c0_i32, %c0_i32_0 : i32, i32
  }
  func.func @transform_9(%arg0: i32) -> (i32, i32, i32) {
    %c0_i32 = arith.constant 0 : i32
    %c0_i32_0 = arith.constant 0 : i32
    %c0_i32_1 = arith.constant 0 : i32
    return %arg0, %c0_i32, %c0_i32_0 : i32, i32, i32
  }
}

</mosaic_0001>

<llo_original>
// kernel: xvector_forward.1
$region0: #{xvector_forward.1}
  #allocation0 [shape = 'u32[]', space=smem, size = 0x4, offset = 0x4, fixed_abs, tag = 'smem constant byte address 0x4 - core index']
  #allocation1 [shape = 'u32[144,128]{1,0:T(1,128)}', space=vmem, size = 0x12000, scoped, tag = 'internal scratch']
  %s0 = inlined_call_operand.vmem [shape: f32[128,24], index: 0, kind: input, shape index: {}]
  %s1 = inlined_call_operand.vmem [shape: bf16[5,24,64], index: 1, kind: input, shape index: {}]
  %s2 = inlined_call_operand.vmem [shape: bf16[3,64,64], index: 2, kind: input, shape index: {}]
  %s3 = inlined_call_operand.vmem [shape: bf16[3,64,64], index: 3, kind: input, shape index: {}]
  %s4 = inlined_call_operand.vmem [shape: bf16[1,64,64], index: 4, kind: input, shape index: {}]
  %s5 = inlined_call_operand.vmem [shape: bf16[1,64,128], index: 5, kind: input, shape index: {}]
  %s6 = inlined_call_operand.vmem [shape: f32[256,32], index: 6, kind: input, shape index: {}]
  %s7 = inlined_call_operand.vmem [shape: f32[32,32], index: 7, kind: input, shape index: {}]
  %s8 = inlined_call_operand.vmem [shape: f32[24,128], index: 8, kind: input, shape index: {}]
  %s9 = inlined_call_operand.hbm [shape: f32[2,2,32], index: 9, kind: output, shape index: {}]
  %s10 = sld [smem:[#allocation0]]
  $region69: #{xvector_forward.1} parent=0
    _
  %s12 = ssub.s32 1, %s10
  %s13 = scalar_select 0, %s12, %s10
  $region1: #{xvector_forward.1} parent=0
    #allocation2 [shape = 'u8[2048]{0}', space=vmem, size = 0x800, scoped, tag = 'output window, operand 0']
    #allocation3 [shape = 's32[2]{0}', space=sflag, size = 0x8, scoped, tag = 'scoped memory for xvector_forward.1']
    %14 = vsyncpa [#allocation3], 0
    %s15 = scalar_lea.sflag [#allocation3], 1
    %16 = vsyncpa %s15, 0
    loop: start=0, step=1, limit=4
    $region2: #{xvector_forward.1} parent=1 // loop_pre_header
      _
    $region3: #{xvector_forward.1} parent=1 // loop_header
      %s18 = sphi 0, %s22
      %p19 = scmp.ge.s32.totalorder %s18, 4
      %s28 = sphi 0, %s30
      %s31 = sphi 0, %s28
      %s32 = sphi 0, %s31
      %s48 = sphi 0, %s32
      %s52 = sphi 0, %s52
      %s54 = sphi 0, %s52
      %s55 = sphi 0, %s54
      %s69 = sphi 0, %s55
      %s73 = sphi 0, %s73
      %s75 = sphi 0, %s73
      %s76 = sphi 0, %s75
      %s90 = sphi 0, %s76
      %s94 = sphi 0, %s94
      %s96 = sphi 0, %s94
      %s97 = sphi 0, %s96
      %s111 = sphi 0, %s97
      %s115 = sphi 0, %s115
      %s117 = sphi 0, %s115
      %s118 = sphi 0, %s117
      %s132 = sphi 0, %s118
      %s136 = sphi 0, %s136
      %s138 = sphi 0, %s136
      %s139 = sphi 0, %s138
      %s153 = sphi 0, %s139
      %s157 = sphi 0, %s157
      %s159 = sphi 0, %s157
      %s160 = sphi 0, %s159
      %s174 = sphi 0, %s160
      %s178 = sphi 0, %s178
      %s180 = sphi 0, %s178
      %s181 = sphi 0, %s180
      %s195 = sphi 0, %s181
      %s199 = sphi 0, %s199
      %s201 = sphi 0, %s199
      %s202 = sphi 0, %s201
      %s216 = sphi 0, %s202
      %s222 = sphi 0, %s224
      %s225 = sphi 0, %s222
      %s226 = sphi 0, %s225
      %s242 = sphi 0, %s226
    $region4: #{xvector_forward.1} parent=1 // loop_header_branch
      %21 = sbr.rel (%p19) target = $region8
    $region5: #{xvector_forward.1} parent=1 // loop_body
      %s23 = ssub.s32 %s18, 1
      %s24 = ssub.s32 %s18, 2
      %s25 = sadd.s32 %s18, 1
      %s26 = ssub.s32 %s18, %s25
      %p27 = scmp.eq.s32.totalorder %s26, 0
      %s29 = sadd.s32 %s28, 1
      %s30 = scalar_select %p27, %s28, %s29
      %p33 = pneg %p27
      %p34 = scmp.eq.s32.totalorder %s18, 1
      %p35 = por %p33, %p34
      %p36 = scmp.ne.s32.totalorder %s28, %s31
      %p37 = scmp.eq.s32.totalorder %s18, 0
      %p38 = por %p36, %p37
      %p39 = scmp.ne.s32.totalorder %s28, %s31
      %p40 = scmp.eq.s32.totalorder %s23, 1
      %p41 = por %p39, %p40
      %p42 = scmp.ne.s32.totalorder %s31, %s32
      %p43 = scmp.eq.s32.totalorder %s23, 0
      %p44 = por %p42, %p43
      %p45 = scmp.ne.s32.totalorder %s31, %s32
      %p46 = scmp.eq.s32.totalorder %s24, 1
      %p47 = por %p45, %p46
      %p49 = scmp.ne.s32.totalorder %s32, %s48
      %p50 = scmp.eq.s32.totalorder %s24, 0
      %p51 = por %p49, %p50
      %s53 = sadd.s32 %s52, 1
      %p56 = scmp.eq.s32.totalorder %s18, 1
      %p57 = scmp.ne.s32.totalorder %s52, %s54
      %p58 = scmp.eq.s32.totalorder %s18, 0
      %p59 = por %p57, %p58
      %p60 = scmp.ne.s32.totalorder %s52, %s54
      %p61 = scmp.eq.s32.totalorder %s23, 1
      %p62 = por %p60, %p61
      %p63 = scmp.ne.s32.totalorder %s54, %s55
      %p64 = scmp.eq.s32.totalorder %s23, 0
      %p65 = por %p63, %p64
      %p66 = scmp.ne.s32.totalorder %s54, %s55
      %p67 = scmp.eq.s32.totalorder %s24, 1
      %p68 = por %p66, %p67
      %p70 = scmp.ne.s32.totalorder %s55, %s69
      %p71 = scmp.eq.s32.totalorder %s24, 0
      %p72 = por %p70, %p71
      %s74 = sadd.s32 %s73, 1
      %p77 = scmp.eq.s32.totalorder %s18, 1
      %p78 = scmp.ne.s32.totalorder %s73, %s75
      %p79 = scmp.eq.s32.totalorder %s18, 0
      %p80 = por %p78, %p79
      %p81 = scmp.ne.s32.totalorder %s73, %s75
      %p82 = scmp.eq.s32.totalorder %s23, 1
      %p83 = por %p81, %p82
      %p84 = scmp.ne.s32.totalorder %s75, %s76
      %p85 = scmp.eq.s32.totalorder %s23, 0
      %p86 = por %p84, %p85
      %p87 = scmp.ne.s32.totalorder %s75, %s76
      %p88 = scmp.eq.s32.totalorder %s24, 1
      %p89 = por %p87, %p88
      %p91 = scmp.ne.s32.totalorder %s76, %s90
      %p92 = scmp.eq.s32.totalorder %s24, 0
      %p93 = por %p91, %p92
      %s95 = sadd.s32 %s94, 1
      %p98 = scmp.eq.s32.totalorder %s18, 1
      %p99 = scmp.ne.s32.totalorder %s94, %s96
      %p100 = scmp.eq.s32.totalorder %s18, 0
      %p101 = por %p99, %p100
      %p102 = scmp.ne.s32.totalorder %s94, %s96
      %p103 = scmp.eq.s32.totalorder %s23, 1
      %p104 = por %p102, %p103
      %p105 = scmp.ne.s32.totalorder %s96, %s97
      %p106 = scmp.eq.s32.totalorder %s23, 0
      %p107 = por %p105, %p106
      %p108 = scmp.ne.s32.totalorder %s96, %s97
      %p109 = scmp.eq.s32.totalorder %s24, 1
      %p110 = por %p108, %p109
      %p112 = scmp.ne.s32.totalorder %s97, %s111
      %p113 = scmp.eq.s32.totalorder %s24, 0
      %p114 = por %p112, %p113
      %s116 = sadd.s32 %s115, 1
      %p119 = scmp.eq.s32.totalorder %s18, 1
      %p120 = scmp.ne.s32.totalorder %s115, %s117
      %p121 = scmp.eq.s32.totalorder %s18, 0
      %p122 = por %p120, %p121
      %p123 = scmp.ne.s32.totalorder %s115, %s117
      %p124 = scmp.eq.s32.totalorder %s23, 1
      %p125 = por %p123, %p124
      %p126 = scmp.ne.s32.totalorder %s117, %s118
      %p127 = scmp.eq.s32.totalorder %s23, 0
      %p128 = por %p126, %p127
      %p129 = scmp.ne.s32.totalorder %s117, %s118
      %p130 = scmp.eq.s32.totalorder %s24, 1
      %p131 = por %p129, %p130
      %p133 = scmp.ne.s32.totalorder %s118, %s132
      %p134 = scmp.eq.s32.totalorder %s24, 0
      %p135 = por %p133, %p134
      %s137 = sadd.s32 %s136, 1
      %p140 = scmp.eq.s32.totalorder %s18, 1
      %p141 = scmp.ne.s32.totalorder %s136, %s138
      %p142 = scmp.eq.s32.totalorder %s18, 0
      %p143 = por %p141, %p142
      %p144 = scmp.ne.s32.totalorder %s136, %s138
      %p145 = scmp.eq.s32.totalorder %s23, 1
      %p146 = por %p144, %p145
      %p147 = scmp.ne.s32.totalorder %s138, %s139
      %p148 = scmp.eq.s32.totalorder %s23, 0
      %p149 = por %p147, %p148
      %p150 = scmp.ne.s32.totalorder %s138, %s139
      %p151 = scmp.eq.s32.totalorder %s24, 1
      %p152 = por %p150, %p151
      %p154 = scmp.ne.s32.totalorder %s139, %s153
      %p155 = scmp.eq.s32.totalorder %s24, 0
      %p156 = por %p154, %p155
      %s158 = sadd.s32 %s157, 1
      %p161 = scmp.eq.s32.totalorder %s18, 1
      %p162 = scmp.ne.s32.totalorder %s157, %s159
      %p163 = scmp.eq.s32.totalorder %s18, 0
      %p164 = por %p162, %p163
      %p165 = scmp.ne.s32.totalorder %s157, %s159
      %p166 = scmp.eq.s32.totalorder %s23, 1
      %p167 = por %p165, %p166
      %p168 = scmp.ne.s32.totalorder %s159, %s160
      %p169 = scmp.eq.s32.totalorder %s23, 0
      %p170 = por %p168, %p169
      %p171 = scmp.ne.s32.totalorder %s159, %s160
      %p172 = scmp.eq.s32.totalorder %s24, 1
      %p173 = por %p171, %p172
      %p175 = scmp.ne.s32.totalorder %s160, %s174
      %p176 = scmp.eq.s32.totalorder %s24, 0
      %p177 = por %p175, %p176
      %s179 = sadd.s32 %s178, 1
      %p182 = scmp.eq.s32.totalorder %s18, 1
      %p183 = scmp.ne.s32.totalorder %s178, %s180
      %p184 = scmp.eq.s32.totalorder %s18, 0
      %p185 = por %p183, %p184
      %p186 = scmp.ne.s32.totalorder %s178, %s180
      %p187 = scmp.eq.s32.totalorder %s23, 1
      %p188 = por %p186, %p187
      %p189 = scmp.ne.s32.totalorder %s180, %s181
      %p190 = scmp.eq.s32.totalorder %s23, 0
      %p191 = por %p189, %p190
      %p192 = scmp.ne.s32.totalorder %s180, %s181
      %p193 = scmp.eq.s32.totalorder %s24, 1
      %p194 = por %p192, %p193
      %p196 = scmp.ne.s32.totalorder %s181, %s195
      %p197 = scmp.eq.s32.totalorder %s24, 0
      %p198 = por %p196, %p197
      %s200 = sadd.s32 %s199, 1
      %p203 = scmp.eq.s32.totalorder %s18, 1
      %p204 = scmp.ne.s32.totalorder %s199, %s201
      %p205 = scmp.eq.s32.totalorder %s18, 0
      %p206 = por %p204, %p205
      %p207 = scmp.ne.s32.totalorder %s199, %s201
      %p208 = scmp.eq.s32.totalorder %s23, 1
      %p209 = por %p207, %p208
      %p210 = scmp.ne.s32.totalorder %s201, %s202
      %p211 = scmp.eq.s32.totalorder %s23, 0
      %p212 = por %p210, %p211
      %p213 = scmp.ne.s32.totalorder %s201, %s202
      %p214 = scmp.eq.s32.totalorder %s24, 1
      %p215 = por %p213, %p214
      %p217 = scmp.ne.s32.totalorder %s202, %s216
      %p218 = scmp.eq.s32.totalorder %s24, 0
      %p219 = por %p217, %p218
      %s220 = ssub.s32 %s18, %s25
      %p221 = scmp.eq.s32.totalorder %s220, 0
      %s223 = sadd.s32 %s222, 1
      %s224 = scalar_select %p221, %s222, %s223
      %p227 = pneg %p221
      %p228 = scmp.eq.s32.totalorder %s18, 1
      %p229 = por %p227, %p228
      %p230 = scmp.ne.s32.totalorder %s222, %s225
      %p231 = scmp.eq.s32.totalorder %s18, 0
      %p232 = por %p230, %p231
      %p233 = scmp.ne.s32.totalorder %s222, %s225
      %p234 = scmp.eq.s32.totalorder %s23, 1
      %p235 = por %p233, %p234
      %p236 = scmp.ne.s32.totalorder %s225, %s226
      %p237 = scmp.eq.s32.totalorder %s23, 0
      %p238 = por %p236, %p237
      %p239 = scmp.ne.s32.totalorder %s225, %s226
      %p240 = scmp.eq.s32.totalorder %s24, 1
      %p241 = por %p239, %p240
      %p243 = scmp.ne.s32.totalorder %s226, %s242
      %p244 = scmp.eq.s32.totalorder %s24, 0
      %p245 = por %p243, %p244
      %p246 = scmp.le.s32.totalorder 1, %s18
      %p247 = scmp.lt.s32.totalorder %s18, 3
      %p248 = pnand %p246, %p247
      %p249 = pneg %p248
      // Predicated region
      $region9: #{xvector_forward.1} parent=5 // pred_check
        _
      $region10: #{xvector_forward.1} parent=5 // pred_check_branch
        %251 = sbr.rel (%p248) target = $region12
      $region11: #{xvector_forward.1} parent=5 // pred_region
        %s252 = ssub.s32 %s18, 1
        // Predicated region
        $region13: #{xvector_forward.1} parent=11 // pred_check
          %p253 = pneg %p65
        $region14: #{xvector_forward.1} parent=11 // pred_check_branch
          %255 = sbr.rel (%p253) target = $region16
        $region15: #{xvector_forward.1} parent=11 // pred_region
          _
        $region16: #{xvector_forward.1} parent=11 // pred_fallthru
          _
        // Predicated region
        $region17: #{xvector_forward.1} parent=11 // pred_check
          %p256 = pneg %p86
        $region18: #{xvector_forward.1} parent=11 // pred_check_branch
          %258 = sbr.rel (%p256) target = $region20
        $region19: #{xvector_forward.1} parent=11 // pred_region
          _
        $region20: #{xvector_forward.1} parent=11 // pred_fallthru
          _
        // Predicated region
        $region21: #{xvector_forward.1} parent=11 // pred_check
          %p259 = pneg %p107
        $region22: #{xvector_forward.1} parent=11 // pred_check_branch
          %261 = sbr.rel (%p259) target = $region24
        $region23: #{xvector_forward.1} parent=11 // pred_region
          _
        $region24: #{xvector_forward.1} parent=11 // pred_fallthru
          _
        // Predicated region
        $region25: #{xvector_forward.1} parent=11 // pred_check
          %p262 = pneg %p128
        $region26: #{xvector_forward.1} parent=11 // pred_check_branch
          %264 = sbr.rel (%p262) target = $region28
        $region27: #{xvector_forward.1} parent=11 // pred_region
          _
        $region28: #{xvector_forward.1} parent=11 // pred_fallthru
          _
        // Predicated region
        $region29: #{xvector_forward.1} parent=11 // pred_check
          %p265 = pneg %p149
        $region30: #{xvector_forward.1} parent=11 // pred_check_branch
          %267 = sbr.rel (%p265) target = $region32
        $region31: #{xvector_forward.1} parent=11 // pred_region
          _
        $region32: #{xvector_forward.1} parent=11 // pred_fallthru
          _
        // Predicated region
        $region33: #{xvector_forward.1} parent=11 // pred_check
          %p268 = pneg %p170
        $region34: #{xvector_forward.1} parent=11 // pred_check_branch
          %270 = sbr.rel (%p268) target = $region36
        $region35: #{xvector_forward.1} parent=11 // pred_region
          _
        $region36: #{xvector_forward.1} parent=11 // pred_fallthru
          _
        // Predicated region
        $region37: #{xvector_forward.1} parent=11 // pred_check
          %p271 = pneg %p191
        $region38: #{xvector_forward.1} parent=11 // pred_check_branch
          %273 = sbr.rel (%p271) target = $region40
        $region39: #{xvector_forward.1} parent=11 // pred_region
          _
        $region40: #{xvector_forward.1} parent=11 // pred_fallthru
          _
        // Predicated region
        $region41: #{xvector_forward.1} parent=11 // pred_check
          %p274 = pneg %p212
        $region42: #{xvector_forward.1} parent=11 // pred_check_branch
          %276 = sbr.rel (%p274) target = $region44
        $region43: #{xvector_forward.1} parent=11 // pred_region
          _
        $region44: #{xvector_forward.1} parent=11 // pred_fallthru
          _
      $region12: #{xvector_forward.1} parent=5 // pred_fallthru
        _
      %p277 = scmp.lt.s32.totalorder %s18, 2
      // Predicated region
      $region45: #{xvector_forward.1} parent=5 // pred_check
        %p278 = pneg %p277
      $region46: #{xvector_forward.1} parent=5 // pred_check_branch
        %280 = sbr.rel (%p278) target = $region48
      $region47: #{xvector_forward.1} parent=5 // pred_region
        // Predicated region
        $region49: #{xvector_forward.1} parent=47 // pred_check
          %p281 = pneg %p38
        $region50: #{xvector_forward.1} parent=47 // pred_check_branch
          %283 = sbr.rel (%p281) target = $region52
        $region51: #{xvector_forward.1} parent=47 // pred_region
          %s284 = smul.u32 8, %s18
          %p285 = scmp.lt.s32.totalorder %s284, 15
          %s286 = scalar_select %p285, %s284, 15
          %s287 = smul.addr %s286, 8
          %s288 = scalar_lea.vmem %s0, %s287
          %s289 = smul.u32 8, %s18
        $region52: #{xvector_forward.1} parent=47 // pred_fallthru
          _
      $region48: #{xvector_forward.1} parent=5 // pred_fallthru
        _
      %p290 = scmp.le.s32.totalorder 1, %s18
      %p291 = scmp.lt.s32.totalorder %s18, 3
      %p292 = pnand %p290, %p291
      %p293 = pneg %p292
      // Predicated region
      $region53: #{xvector_forward.1} parent=5 // pred_check
        _
      $region54: #{xvector_forward.1} parent=5 // pred_check_branch
        %295 = sbr.rel (%p292) target = $region56
      $region55: #{xvector_forward.1} parent=5 // pred_region
        %s296 = ssub.s32 %s18, 1
        %s297 = smul.u32 8, %s23
        %p298 = scmp.lt.s32.totalorder %s297, 15
        %s299 = scalar_select %p298, %s297, 15
        %s300 = smul.addr %s299, 8
        %s301 = scalar_lea.vmem %s0, %s300
        %p302 = pneg %p44
        %p303 = pneg %p41
        %p304 = pneg %p65
        %p305 = pneg %p62
        %p306 = pneg %p86
        %p307 = pneg %p83
        %p308 = pneg %p107
        %p309 = pneg %p104
        %p310 = pneg %p128
        %p311 = pneg %p125
        %p312 = pneg %p149
        %p313 = pneg %p146
        %p314 = pneg %p170
        %p315 = pneg %p167
        %p316 = pneg %p191
        %p317 = pneg %p188
        %p318 = pneg %p212
        %p319 = pneg %p209
        %p320 = pneg %p238
        %p321 = pneg %p235
        %s322 = sand.u32 %s225, 1
        %s323 = scalar_lea.sflag [#allocation3], %s322
        %s324 = sand.u32 %s225, 1
        %s325 = smul.addr %s324, 2
        %s326 = scalar_lea.vmem [#allocation2], %s325
        %s327 = smul.u32 8, %s23
        %p328 = scmp.lt.s32.totalorder %s327, 15
        %s329 = scalar_select %p328, %s327, 15
        %s330 = smul.addr %s329, 8
        %s331 = scalar_lea.vmem %s0, %s330
        %s332 = smul.u32 8, %s23
        %v334 = vld [vmem:[%s331] sm:$0xff]
        %v335 = vld [vmem:[%s331 + $0x8] sm:$0xff]
        %v336 = vld [vmem:[%s331 + $0x10] sm:$0xff]
        %v337 = vld [vmem:[%s331 + $0x18] sm:$0xff]
        %v338 = vld [vmem:[%s331 + $0x20] sm:$0xff]
        %v339 = vld [vmem:[%s331 + $0x28] sm:$0xff]
        %v340 = vld [vmem:[%s331 + $0x30] sm:$0xff]
        %v341 = vld [vmem:[%s331 + $0x38] sm:$0xff]
        %v342 = vpack.c.bf16 %v335, %v334
        %v343 = vpack.c.bf16 %v337, %v336
        %v344 = vpack.c.bf16 %v339, %v338
        %v345 = vpack.c.bf16 %v341, %v340
        %v346 = vld [vmem:[%s1] sm:$0xf]
        %v347 = vld [vmem:[%s1 + $0x4] sm:$0xf]
        %v348 = vld [vmem:[%s1 + $0x8] sm:$0xf]
        %s349 = scalar_lea.vmem %s1, 12
        %v350 = vld [vmem:[%s349] sm:$0xf]
        %v351 = vld [vmem:[%s349 + $0x4] sm:$0xf]
        %v352 = vld [vmem:[%s349 + $0x8] sm:$0xf]
        %v356 = vunpack.c.l.b16 %v350
        %v357 = vunpack.c.l.b16 %v351
        %v358 = vunpack.c.l.b16 %v352
        %v359 = vpack.c.b16 %v357, %v356
        %v360 = vpack.c.b16 %v358, %v358
        %vm362 = vcmask 195584
        %v364 = vsel %vm362, %v342, 0
        %v367 = vsel %vm362, %v343, 0
        %v370 = vsel %vm362, %v344, 0
        %v373 = vsel %vm362, %v345, 0
        %vm375 = vcmask 1043456
        %v377 = vsel %vm375, %v360, 0
        %379 = vmatprep.subr.bf16.mxu0 0
        %380 = vmatpush1.bf16.msra.mxu0 0
        %381 = vmatprep.subr.bf16.mxu0 0
        %382 = vmatpush1.bf16.msra.mxu0 0
        %383 = vmatprep.subr.bf16.mxu0 0
        %384 = vmatpush1.bf16.msra.mxu0 0
        %385 = vmatprep.subr.bf16.mxu0 0
        %386 = vmatpush1.bf16.msra.mxu0 0
        %387 = vmatprep.subr.bf16.mxu0 0
        %388 = vmatpush1.bf16.msra.mxu0 0
        %389 = vmatprep.subr.bf16.mxu0 0
        %390 = vmatpush1.bf16.msra.mxu0 0
        %391 = vmatprep.subr.bf16.mxu0 0
        %392 = vmatpush1.bf16.msra.mxu0 %v377
        %393 = vmatprep.subr.bf16.mxu0 0
        %394 = vmatpush1.bf16.msra.mxu0 %v359
        %395 = vmatprep.subr.bf16.mxu0 0
        %396 = vmatpush2.bf16.msra.mxu0 0
        %397 = vmatprep.subr.bf16.mxu0 0
        %398 = vmatpush2.bf16.msra.mxu0 0
        %399 = vmatprep.subr.bf16.mxu0 0
        %400 = vmatpush2.bf16.msra.mxu0 0
        %401 = vmatprep.subr.bf16.mxu0 0
        %402 = vmatpush2.bf16.msra.mxu0 0
        %403 = vmatprep.subr.bf16.mxu0 0
        %404 = vmatpush2.bf16.msra.mxu0 0
        %405 = vmatprep.subr.bf16.mxu0 0
        %406 = vmatpush2.bf16.msra.mxu0 0
        %407 = vmatprep.subr.bf16.mxu0 0
        %408 = vmatpush2.bf16.msra.mxu0 0
        %409 = vmatprep.subr.bf16.mxu0 0
        %410 = vmatpush2.bf16.msra.mxu0 0
        %411 = vmatprep.mubr.bf16.mxu0 0
        %412 = vmatmul.mubr.bf16.gmra.mxu0 %v364
        %v413 = vpop.f32.mrf.mxu0
        %v414 = vadd.f32 0.0, %v413
        %v415 = vpop.f32.mrf.mxu0
        %v416 = vpop.f32.mrf.mxu0
        %v417 = vadd.f32 0.0, %v416
        %v418 = vpop.f32.mrf.mxu0
        %419 = vmatprep.mubr.bf16.mxu0 0
        %420 = vmatmul.mubr.bf16.gmra.mxu0 %v367
        %v421 = vpop.f32.mrf.mxu0
        %v422 = vadd.f32 0.0, %v421
        %v423 = vpop.f32.mrf.mxu0
        %v424 = vpop.f32.mrf.mxu0
        %v425 = vadd.f32 0.0, %v424
        %v426 = vpop.f32.mrf.mxu0
        %427 = vmatprep.mubr.bf16.mxu0 0
        %428 = vmatmul.mubr.bf16.gmra.mxu0 %v370
        %v429 = vpop.f32.mrf.mxu0
        %v430 = vadd.f32 0.0, %v429
        %v431 = vpop.f32.mrf.mxu0
        %v432 = vpop.f32.mrf.mxu0
        %v433 = vadd.f32 0.0, %v432
        %v434 = vpop.f32.mrf.mxu0
        %435 = vmatprep.mubr.bf16.mxu0 0
        %436 = vmatmul.mubr.bf16.gmra.mxu0 %v373
        %v437 = vpop.f32.mrf.mxu0
        %v438 = vadd.f32 0.0, %v437
        %v439 = vpop.f32.mrf.mxu0
        %v440 = vpop.f32.mrf.mxu0
        %v441 = vadd.f32 0.0, %v440
        %v442 = vpop.f32.mrf.mxu0
        %443 = vdwg.mxu0
        %v444 = vrot.slane %v414, 1
        %v445 = vrot.slane %v417, 1
        %v446 = vrot.slane %v422, 1
        %v447 = vrot.slane %v425, 1
        %v448 = vrot.slane %v430, 1
        %v449 = vrot.slane %v433, 1
        %v450 = vrot.slane %v438, 1
        %v451 = vrot.slane %v441, 1
        %v452 = vlaneseq
        %v453 = vshrl.u32 %v452, 7
        %vm454 = vcmp.lt.s32.totalorder %v453, 7
        %v455 = vsel %vm454, %v450, %v451
        %v456 = vsel %vm454, %v449, %v450
        %v457 = vsel %vm454, %v448, %v449
        %v458 = vsel %vm454, %v447, %v448
        %v459 = vsel %vm454, %v446, %v447
        %v460 = vsel %vm454, %v445, %v446
        %v461 = vsel %vm454, %v444, %v445
        %v462 = vsel %vm454, %v451, %v444
        %v466 = vunpack.c.l.b16 %v346
        %v467 = vunpack.c.l.b16 %v347
        %v468 = vunpack.c.l.b16 %v348
        %v469 = vpack.c.b16 %v467, %v466
        %v470 = vpack.c.b16 %v468, %v468
        %v473 = vsel %vm375, %v470, 0
        %475 = vmatprep.subr.bf16.mxu0 0
        %476 = vmatpush1.bf16.msra.mxu0 0
        %477 = vmatprep.subr.bf16.mxu0 0
        %478 = vmatpush1.bf16.msra.mxu0 0
        %479 = vmatprep.subr.bf16.mxu0 0
        %480 = vmatpush1.bf16.msra.mxu0 0
        %481 = vmatprep.subr.bf16.mxu0 0
        %482 = vmatpush1.bf16.msra.mxu0 0
        %483 = vmatprep.subr.bf16.mxu0 0
        %484 = vmatpush1.bf16.msra.mxu0 0
        %485 = vmatprep.subr.bf16.mxu0 0
        %486 = vmatpush1.bf16.msra.mxu0 0
        %487 = vmatprep.subr.bf16.mxu0 0
        %488 = vmatpush1.bf16.msra.mxu0 %v473
        %489 = vmatprep.subr.bf16.mxu0 0
        %490 = vmatpush1.bf16.msra.mxu0 %v469
        %491 = vmatprep.subr.bf16.mxu0 0
        %492 = vmatpush2.bf16.msra.mxu0 0
        %493 = vmatprep.subr.bf16.mxu0 0
        %494 = vmatpush2.bf16.msra.mxu0 0
        %495 = vmatprep.subr.bf16.mxu0 0
        %496 = vmatpush2.bf16.msra.mxu0 0
        %497 = vmatprep.subr.bf16.mxu0 0
        %498 = vmatpush2.bf16.msra.mxu0 0
        %499 = vmatprep.subr.bf16.mxu0 0
        %500 = vmatpush2.bf16.msra.mxu0 0
        %501 = vmatprep.subr.bf16.mxu0 0
        %502 = vmatpush2.bf16.msra.mxu0 0
        %503 = vmatprep.subr.bf16.mxu0 0
        %504 = vmatpush2.bf16.msra.mxu0 0
        %505 = vmatprep.subr.bf16.mxu0 0
        %506 = vmatpush2.bf16.msra.mxu0 0
        %507 = vmatprep.mubr.bf16.mxu0 0
        %508 = vmatmul.mubr.bf16.gmra.mxu0 %v364
        %v509 = vpop.f32.mrf.mxu0
        %v510 = vadd.f32 %v461, %v509
        %v511 = vpop.f32.mrf.mxu0
        %v512 = vpop.f32.mrf.mxu0
        %v513 = vadd.f32 %v460, %v512
        %v514 = vpop.f32.mrf.mxu0
        %515 = vmatprep.mubr.bf16.mxu0 0
        %516 = vmatmul.mubr.bf16.gmra.mxu0 %v367
        %v517 = vpop.f32.mrf.mxu0
        %v518 = vadd.f32 %v459, %v517
        %v519 = vpop.f32.mrf.mxu0
        %v520 = vpop.f32.mrf.mxu0
        %v521 = vadd.f32 %v458, %v520
        %v522 = vpop.f32.mrf.mxu0
        %523 = vmatprep.mubr.bf16.mxu0 0
        %524 = vmatmul.mubr.bf16.gmra.mxu0 %v370
        %v525 = vpop.f32.mrf.mxu0
        %v526 = vadd.f32 %v457, %v525
        %v527 = vpop.f32.mrf.mxu0
        %v528 = vpop.f32.mrf.mxu0
        %v529 = vadd.f32 %v456, %v528
        %v530 = vpop.f32.mrf.mxu0
        %531 = vmatprep.mubr.bf16.mxu0 0
        %532 = vmatmul.mubr.bf16.gmra.mxu0 %v373
        %v533 = vpop.f32.mrf.mxu0
        %v534 = vadd.f32 %v455, %v533
        %v535 = vpop.f32.mrf.mxu0
        %v536 = vpop.f32.mrf.mxu0
        %v537 = vadd.f32 %v462, %v536
        %v538 = vpop.f32.mrf.mxu0
        %539 = vdwg.mxu0
        %s540 = scalar_lea.vmem %s1, 24
        %v541 = vld [vmem:[%s540] sm:$0xf]
        %v542 = vld [vmem:[%s540 + $0x4] sm:$0xf]
        %v543 = vld [vmem:[%s540 + $0x8] sm:$0xf]
        %v547 = vunpack.c.l.b16 %v541
        %v548 = vunpack.c.l.b16 %v542
        %v549 = vunpack.c.l.b16 %v543
        %v550 = vpack.c.b16 %v548, %v547
        %v551 = vpack.c.b16 %v549, %v549
        %v554 = vsel %vm375, %v551, 0
        %556 = vmatprep.subr.bf16.mxu0 0
        %557 = vmatpush1.bf16.msra.mxu0 0
        %558 = vmatprep.subr.bf16.mxu0 0
        %559 = vmatpush1.bf16.msra.mxu0 0
        %560 = vmatprep.subr.bf16.mxu0 0
        %561 = vmatpush1.bf16.msra.mxu0 0
        %562 = vmatprep.subr.bf16.mxu0 0
        %563 = vmatpush1.bf16.msra.mxu0 0
        %564 = vmatprep.subr.bf16.mxu0 0
        %565 = vmatpush1.bf16.msra.mxu0 0
        %566 = vmatprep.subr.bf16.mxu0 0
        %567 = vmatpush1.bf16.msra.mxu0 0
        %568 = vmatprep.subr.bf16.mxu0 0
        %569 = vmatpush1.bf16.msra.mxu0 %v554
        %570 = vmatprep.subr.bf16.mxu0 0
        %571 = vmatpush1.bf16.msra.mxu0 %v550
        %572 = vmatprep.subr.bf16.mxu0 0
        %573 = vmatpush2.bf16.msra.mxu0 0
        %574 = vmatprep.subr.bf16.mxu0 0
        %575 = vmatpush2.bf16.msra.mxu0 0
        %576 = vmatprep.subr.bf16.mxu0 0
        %577 = vmatpush2.bf16.msra.mxu0 0
        %578 = vmatprep.subr.bf16.mxu0 0
        %579 = vmatpush2.bf16.msra.mxu0 0
        %580 = vmatprep.subr.bf16.mxu0 0
        %581 = vmatpush2.bf16.msra.mxu0 0
        %582 = vmatprep.subr.bf16.mxu0 0
        %583 = vmatpush2.bf16.msra.mxu0 0
        %584 = vmatprep.subr.bf16.mxu0 0
        %585 = vmatpush2.bf16.msra.mxu0 0
        %586 = vmatprep.subr.bf16.mxu0 0
        %587 = vmatpush2.bf16.msra.mxu0 0
        %588 = vmatprep.mubr.bf16.mxu0 0
        %589 = vmatmul.mubr.bf16.gmra.mxu0 %v364
        %v590 = vpop.f32.mrf.mxu0
        %v591 = vadd.f32 0.0, %v590
        %v592 = vpop.f32.mrf.mxu0
        %v593 = vpop.f32.mrf.mxu0
        %v594 = vadd.f32 0.0, %v593
        %v595 = vpop.f32.mrf.mxu0
        %596 = vmatprep.mubr.bf16.mxu0 0
        %597 = vmatmul.mubr.bf16.gmra.mxu0 %v367
        %v598 = vpop.f32.mrf.mxu0
        %v599 = vadd.f32 0.0, %v598
        %v600 = vpop.f32.mrf.mxu0
        %v601 = vpop.f32.mrf.mxu0
        %v602 = vadd.f32 0.0, %v601
        %v603 = vpop.f32.mrf.mxu0
        %604 = vmatprep.mubr.bf16.mxu0 0
        %605 = vmatmul.mubr.bf16.gmra.mxu0 %v370
        %v606 = vpop.f32.mrf.mxu0
        %v607 = vadd.f32 0.0, %v606
        %v608 = vpop.f32.mrf.mxu0
        %v609 = vpop.f32.mrf.mxu0
        %v610 = vadd.f32 0.0, %v609
        %v611 = vpop.f32.mrf.mxu0
        %612 = vmatprep.mubr.bf16.mxu0 0
        %613 = vmatmul.mubr.bf16.gmra.mxu0 %v373
        %v614 = vpop.f32.mrf.mxu0
        %v615 = vadd.f32 0.0, %v614
        %v616 = vpop.f32.mrf.mxu0
        %v617 = vpop.f32.mrf.mxu0
        %v618 = vadd.f32 0.0, %v617
        %v619 = vpop.f32.mrf.mxu0
        %620 = vdwg.mxu0
        %v621 = vrot.slane %v591, 2
        %v622 = vrot.slane %v594, 2
        %v623 = vrot.slane %v599, 2
        %v624 = vrot.slane %v602, 2
        %v625 = vrot.slane %v607, 2
        %v626 = vrot.slane %v610, 2
        %v627 = vrot.slane %v615, 2
        %v628 = vrot.slane %v618, 2
        %vm629 = vcmp.lt.s32.totalorder %v453, 6
        %v630 = vsel %vm629, %v627, %v628
        %v631 = vsel %vm629, %v626, %v627
        %v632 = vsel %vm629, %v625, %v626
        %v633 = vsel %vm629, %v624, %v625
        %v634 = vsel %vm629, %v623, %v624
        %v635 = vsel %vm629, %v622, %v623
        %v636 = vsel %vm629, %v621, %v622
        %v637 = vsel %vm629, %v628, %v621
        %v638 = vadd.f32 %v510, %v636
        %v639 = vadd.f32 %v513, %v635
        %v640 = vadd.f32 %v518, %v634
        %v641 = vadd.f32 %v521, %v633
        %v642 = vadd.f32 %v526, %v632
        %v643 = vadd.f32 %v529, %v631
        %v644 = vadd.f32 %v534, %v630
        %v645 = vadd.f32 %v537, %v637
        %s646 = scalar_lea.vmem %s1, 36
        %v647 = vld [vmem:[%s646] sm:$0xf]
        %v648 = vld [vmem:[%s646 + $0x4] sm:$0xf]
        %v649 = vld [vmem:[%s646 + $0x8] sm:$0xf]
        %v653 = vunpack.c.l.b16 %v647
        %v654 = vunpack.c.l.b16 %v648
        %v655 = vunpack.c.l.b16 %v649
        %v656 = vpack.c.b16 %v654, %v653
        %v657 = vpack.c.b16 %v655, %v655
        %v660 = vsel %vm375, %v657, 0
        %662 = vmatprep.subr.bf16.mxu0 0
        %663 = vmatpush1.bf16.msra.mxu0 0
        %664 = vmatprep.subr.bf16.mxu0 0
        %665 = vmatpush1.bf16.msra.mxu0 0
        %666 = vmatprep.subr.bf16.mxu0 0
        %667 = vmatpush1.bf16.msra.mxu0 0
        %668 = vmatprep.subr.bf16.mxu0 0
        %669 = vmatpush1.bf16.msra.mxu0 0
        %670 = vmatprep.subr.bf16.mxu0 0
        %671 = vmatpush1.bf16.msra.mxu0 0
        %672 = vmatprep.subr.bf16.mxu0 0
        %673 = vmatpush1.bf16.msra.mxu0 0
        %674 = vmatprep.subr.bf16.mxu0 0
        %675 = vmatpush1.bf16.msra.mxu0 %v660
        %676 = vmatprep.subr.bf16.mxu0 0
        %677 = vmatpush1.bf16.msra.mxu0 %v656
        %678 = vmatprep.subr.bf16.mxu0 0
        %679 = vmatpush2.bf16.msra.mxu0 0
        %680 = vmatprep.subr.bf16.mxu0 0
        %681 = vmatpush2.bf16.msra.mxu0 0
        %682 = vmatprep.subr.bf16.mxu0 0
        %683 = vmatpush2.bf16.msra.mxu0 0
        %684 = vmatprep.subr.bf16.mxu0 0
        %685 = vmatpush2.bf16.msra.mxu0 0
        %686 = vmatprep.subr.bf16.mxu0 0
        %687 = vmatpush2.bf16.msra.mxu0 0
        %688 = vmatprep.subr.bf16.mxu0 0
        %689 = vmatpush2.bf16.msra.mxu0 0
        %690 = vmatprep.subr.bf16.mxu0 0
        %691 = vmatpush2.bf16.msra.mxu0 0
        %692 = vmatprep.subr.bf16.mxu0 0
        %693 = vmatpush2.bf16.msra.mxu0 0
        %694 = vmatprep.mubr.bf16.mxu0 0
        %695 = vmatmul.mubr.bf16.gmra.mxu0 %v364
        %v696 = vpop.f32.mrf.mxu0
        %v697 = vadd.f32 0.0, %v696
        %v698 = vpop.f32.mrf.mxu0
        %v699 = vpop.f32.mrf.mxu0
        %v700 = vadd.f32 0.0, %v699
        %v701 = vpop.f32.mrf.mxu0
        %702 = vmatprep.mubr.bf16.mxu0 0
        %703 = vmatmul.mubr.bf16.gmra.mxu0 %v367
        %v704 = vpop.f32.mrf.mxu0
        %v705 = vadd.f32 0.0, %v704
        %v706 = vpop.f32.mrf.mxu0
        %v707 = vpop.f32.mrf.mxu0
        %v708 = vadd.f32 0.0, %v707
        %v709 = vpop.f32.mrf.mxu0
        %710 = vmatprep.mubr.bf16.mxu0 0
        %711 = vmatmul.mubr.bf16.gmra.mxu0 %v370
        %v712 = vpop.f32.mrf.mxu0
        %v713 = vadd.f32 0.0, %v712
        %v714 = vpop.f32.mrf.mxu0
        %v715 = vpop.f32.mrf.mxu0
        %v716 = vadd.f32 0.0, %v715
        %v717 = vpop.f32.mrf.mxu0
        %718 = vmatprep.mubr.bf16.mxu0 0
        %719 = vmatmul.mubr.bf16.gmra.mxu0 %v373
        %v720 = vpop.f32.mrf.mxu0
        %v721 = vadd.f32 0.0, %v720
        %v722 = vpop.f32.mrf.mxu0
        %v723 = vpop.f32.mrf.mxu0
        %v724 = vadd.f32 0.0, %v723
        %v725 = vpop.f32.mrf.mxu0
        %726 = vdwg.mxu0
        %v727 = vrot.slane %v697, 3
        %v728 = vrot.slane %v700, 3
        %v729 = vrot.slane %v705, 3
        %v730 = vrot.slane %v708, 3
        %v731 = vrot.slane %v713, 3
        %v732 = vrot.slane %v716, 3
        %v733 = vrot.slane %v721, 3
        %v734 = vrot.slane %v724, 3
        %vm735 = vcmp.lt.s32.totalorder %v453, 5
        %v736 = vsel %vm735, %v733, %v734
        %v737 = vsel %vm735, %v732, %v733
        %v738 = vsel %vm735, %v731, %v732
        %v739 = vsel %vm735, %v730, %v731
        %v740 = vsel %vm735, %v729, %v730
        %v741 = vsel %vm735, %v728, %v729
        %v742 = vsel %vm735, %v727, %v728
        %v743 = vsel %vm735, %v734, %v727
        %v744 = vadd.f32 %v638, %v742
        %v745 = vadd.f32 %v639, %v741
        %v746 = vadd.f32 %v640, %v740
        %v747 = vadd.f32 %v641, %v739
        %v748 = vadd.f32 %v642, %v738
        %v749 = vadd.f32 %v643, %v737
        %v750 = vadd.f32 %v644, %v736
        %v751 = vadd.f32 %v645, %v743
        %s752 = scalar_lea.vmem %s1, 48
        %v753 = vld [vmem:[%s752] sm:$0xf]
        %v754 = vld [vmem:[%s752 + $0x4] sm:$0xf]
        %v755 = vld [vmem:[%s752 + $0x8] sm:$0xf]
        %v759 = vunpack.c.l.b16 %v753
        %v760 = vunpack.c.l.b16 %v754
        %v761 = vunpack.c.l.b16 %v755
        %v762 = vpack.c.b16 %v760, %v759
        %v763 = vpack.c.b16 %v761, %v761
        %v766 = vsel %vm375, %v763, 0
        %768 = vmatprep.subr.bf16.mxu0 0
        %769 = vmatpush1.bf16.msra.mxu0 0
        %770 = vmatprep.subr.bf16.mxu0 0
        %771 = vmatpush1.bf16.msra.mxu0 0
        %772 = vmatprep.subr.bf16.mxu0 0
        %773 = vmatpush1.bf16.msra.mxu0 0
        %774 = vmatprep.subr.bf16.mxu0 0
        %775 = vmatpush1.bf16.msra.mxu0 0
        %776 = vmatprep.subr.bf16.mxu0 0
        %777 = vmatpush1.bf16.msra.mxu0 0
        %778 = vmatprep.subr.bf16.mxu0 0
        %779 = vmatpush1.bf16.msra.mxu0 0
        %780 = vmatprep.subr.bf16.mxu0 0
        %781 = vmatpush1.bf16.msra.mxu0 %v766
        %782 = vmatprep.subr.bf16.mxu0 0
        %783 = vmatpush1.bf16.msra.mxu0 %v762
        %784 = vmatprep.subr.bf16.mxu0 0
        %785 = vmatpush2.bf16.msra.mxu0 0
        %786 = vmatprep.subr.bf16.mxu0 0
        %787 = vmatpush2.bf16.msra.mxu0 0
        %788 = vmatprep.subr.bf16.mxu0 0
        %789 = vmatpush2.bf16.msra.mxu0 0
        %790 = vmatprep.subr.bf16.mxu0 0
        %791 = vmatpush2.bf16.msra.mxu0 0
        %792 = vmatprep.subr.bf16.mxu0 0
        %793 = vmatpush2.bf16.msra.mxu0 0
        %794 = vmatprep.subr.bf16.mxu0 0
        %795 = vmatpush2.bf16.msra.mxu0 0
        %796 = vmatprep.subr.bf16.mxu0 0
        %797 = vmatpush2.bf16.msra.mxu0 0
        %798 = vmatprep.subr.bf16.mxu0 0
        %799 = vmatpush2.bf16.msra.mxu0 0
        %800 = vmatprep.mubr.bf16.mxu0 0
        %801 = vmatmul.mubr.bf16.gmra.mxu0 %v364
        %v802 = vpop.f32.mrf.mxu0
        %v803 = vadd.f32 0.0, %v802
        %v804 = vpop.f32.mrf.mxu0
        %v805 = vpop.f32.mrf.mxu0
        %v806 = vadd.f32 0.0, %v805
        %v807 = vpop.f32.mrf.mxu0
        %808 = vmatprep.mubr.bf16.mxu0 0
        %809 = vmatmul.mubr.bf16.gmra.mxu0 %v367
        %v810 = vpop.f32.mrf.mxu0
        %v811 = vadd.f32 0.0, %v810
        %v812 = vpop.f32.mrf.mxu0
        %v813 = vpop.f32.mrf.mxu0
        %v814 = vadd.f32 0.0, %v813
        %v815 = vpop.f32.mrf.mxu0
        %816 = vmatprep.mubr.bf16.mxu0 0
        %817 = vmatmul.mubr.bf16.gmra.mxu0 %v370
        %v818 = vpop.f32.mrf.mxu0
        %v819 = vadd.f32 0.0, %v818
        %v820 = vpop.f32.mrf.mxu0
        %v821 = vpop.f32.mrf.mxu0
        %v822 = vadd.f32 0.0, %v821
        %v823 = vpop.f32.mrf.mxu0
        %824 = vmatprep.mubr.bf16.mxu0 0
        %825 = vmatmul.mubr.bf16.gmra.mxu0 %v373
        %v826 = vpop.f32.mrf.mxu0
        %v827 = vadd.f32 0.0, %v826
        %v828 = vpop.f32.mrf.mxu0
        %v829 = vpop.f32.mrf.mxu0
        %v830 = vadd.f32 0.0, %v829
        %v831 = vpop.f32.mrf.mxu0
        %832 = vdwg.mxu0
        %v833 = vrot.slane %v803, 4
        %v834 = vrot.slane %v806, 4
        %v835 = vrot.slane %v811, 4
        %v836 = vrot.slane %v814, 4
        %v837 = vrot.slane %v819, 4
        %v838 = vrot.slane %v822, 4
        %v839 = vrot.slane %v827, 4
        %v840 = vrot.slane %v830, 4
        %vm841 = vcmp.lt.s32.totalorder %v453, 4
        %v842 = vsel %vm841, %v839, %v840
        %v843 = vsel %vm841, %v838, %v839
        %v844 = vsel %vm841, %v837, %v838
        %v845 = vsel %vm841, %v836, %v837
        %v846 = vsel %vm841, %v835, %v836
        %v847 = vsel %vm841, %v834, %v835
        %v848 = vsel %vm841, %v833, %v834
        %v849 = vsel %vm841, %v840, %v833
        %v850 = vadd.f32 %v744, %v848
        %v851 = vadd.f32 %v745, %v847
        %v852 = vadd.f32 %v746, %v846
        %v853 = vadd.f32 %v747, %v845
        %v854 = vadd.f32 %v748, %v844
        %v855 = vadd.f32 %v749, %v843
        %v856 = vadd.f32 %v750, %v842
        %v857 = vadd.f32 %v751, %v849
        %v858 = vld [vmem:[%s8] sm:$0x1]
        %v859 = vld [vmem:[%s8 + $0x1] sm:$0x1]
        %v860 = vld [vmem:[%s8 + $0x2] sm:$0x1]
        %v861 = vlaneseq
        %v862 = vshrl.u32 %v861, 7
        %v863 = vsub.s32 0, %v862
        %v864 = vrot.slane %v858, %v863
        %v865 = vadd.f32 %v850, %v864
        %v866 = vadd.f32 %v851, %v864
        %v867 = vadd.f32 %v852, %v864
        %v868 = vadd.f32 %v853, %v864
        %v869 = vadd.f32 %v854, %v864
        %v870 = vadd.f32 %v855, %v864
        %v871 = vadd.f32 %v856, %v864
        %v872 = vadd.f32 %v857, %v864
        %vm873 = vcmp.ge.f32.partialorder %v865, 0.0
        %vm874 = vcmp.ge.f32.partialorder %v866, 0.0
        %vm875 = vcmp.ge.f32.partialorder %v867, 0.0
        %vm876 = vcmp.ge.f32.partialorder %v868, 0.0
        %vm877 = vcmp.ge.f32.partialorder %v869, 0.0
        %vm878 = vcmp.ge.f32.partialorder %v870, 0.0
        %vm879 = vcmp.ge.f32.partialorder %v871, 0.0
        %vm880 = vcmp.ge.f32.partialorder %v872, 0.0
        %v881 = vmul.f32 %v859, 0.01
        %v882 = vlaneseq
        %v883 = vshrl.u32 %v882, 7
        %v884 = vsub.s32 0, %v883
        %v885 = vrot.slane %v859, %v884
        %v886 = vlaneseq
        %v887 = vshrl.u32 %v886, 7
        %v888 = vsub.s32 0, %v887
        %v889 = vrot.slane %v881, %v888
        %v890 = vsel %vm873, %v885, %v889
        %v891 = vsel %vm874, %v885, %v889
        %v892 = vsel %vm875, %v885, %v889
        %v893 = vsel %vm876, %v885, %v889
        %v894 = vsel %vm877, %v885, %v889
        %v895 = vsel %vm878, %v885, %v889
        %v896 = vsel %vm879, %v885, %v889
        %v897 = vsel %vm880, %v885, %v889
        %v898 = vmul.f32 %v865, %v890
        %v899 = vmul.f32 %v866, %v891
        %v900 = vmul.f32 %v867, %v892
        %v901 = vmul.f32 %v868, %v893
        %v902 = vmul.f32 %v869, %v894
        %v903 = vmul.f32 %v870, %v895
        %v904 = vmul.f32 %v871, %v896
        %v905 = vmul.f32 %v872, %v897
        %v906 = vlaneseq
        %v907 = vshrl.u32 %v906, 7
        %v908 = vsub.s32 0, %v907
        %v909 = vrot.slane %v860, %v908
        %v910 = vadd.f32 %v898, %v909
        %v911 = vadd.f32 %v899, %v909
        %v912 = vadd.f32 %v900, %v909
        %v913 = vadd.f32 %v901, %v909
        %v914 = vadd.f32 %v902, %v909
        %v915 = vadd.f32 %v903, %v909
        %v916 = vadd.f32 %v904, %v909
        %v917 = vadd.f32 %v905, %v909
        %v918 = vpack.c.bf16 %v911, %v910
        %v919 = vpack.c.bf16 %v913, %v912
        %v920 = vpack.c.bf16 %v915, %v914
        %v921 = vpack.c.bf16 %v917, %v916
        %v922 = vld [vmem:[%s2] sm:$0xf]
        %v923 = vld [vmem:[%s2 + $0x4] sm:$0xf]
        %v924 = vld [vmem:[%s2 + $0x8] sm:$0xf]
        %v925 = vld [vmem:[%s2 + $0xc] sm:$0xf]
        %v926 = vld [vmem:[%s2 + $0x10] sm:$0xf]
        %v927 = vld [vmem:[%s2 + $0x14] sm:$0xf]
        %v928 = vld [vmem:[%s2 + $0x18] sm:$0xf]
        %v929 = vld [vmem:[%s2 + $0x1c] sm:$0xf]
        %s930 = scalar_lea.vmem %s2, 32
        %v931 = vld [vmem:[%s930] sm:$0xf]
        %v932 = vld [vmem:[%s930 + $0x4] sm:$0xf]
        %v933 = vld [vmem:[%s930 + $0x8] sm:$0xf]
        %v934 = vld [vmem:[%s930 + $0xc] sm:$0xf]
        %v935 = vld [vmem:[%s930 + $0x10] sm:$0xf]
        %v936 = vld [vmem:[%s930 + $0x14] sm:$0xf]
        %v937 = vld [vmem:[%s930 + $0x18] sm:$0xf]
        %v938 = vld [vmem:[%s930 + $0x1c] sm:$0xf]
        %v947 = vunpack.c.l.b16 %v931
        %v948 = vunpack.c.l.b16 %v932
        %v949 = vunpack.c.l.b16 %v933
        %v950 = vunpack.c.l.b16 %v934
        %v951 = vunpack.c.l.b16 %v935
        %v952 = vunpack.c.l.b16 %v936
        %v953 = vunpack.c.l.b16 %v937
        %v954 = vunpack.c.l.b16 %v938
        %v955 = vpack.c.b16 %v948, %v947
        %v956 = vpack.c.b16 %v950, %v949
        %v957 = vpack.c.b16 %v952, %v951
        %v958 = vpack.c.b16 %v954, %v953
        %vm963 = vcmask 523264
        %v965 = vsel %vm963, %v918, 0
        %v968 = vsel %vm963, %v919, 0
        %v971 = vsel %vm963, %v920, 0
        %v974 = vsel %vm963, %v921, 0
        %976 = vmatprep.subr.bf16.mxu0 0
        %977 = vmatpush1.bf16.msra.mxu0 0
        %978 = vmatprep.subr.bf16.mxu0 0
        %979 = vmatpush1.bf16.msra.mxu0 0
        %980 = vmatprep.subr.bf16.mxu0 0
        %981 = vmatpush1.bf16.msra.mxu0 0
        %982 = vmatprep.subr.bf16.mxu0 0
        %983 = vmatpush1.bf16.msra.mxu0 0
        %984 = vmatprep.subr.bf16.mxu0 0
        %985 = vmatpush1.bf16.msra.mxu0 %v958
        %986 = vmatprep.subr.bf16.mxu0 0
        %987 = vmatpush1.bf16.msra.mxu0 %v957
        %988 = vmatprep.subr.bf16.mxu0 0
        %989 = vmatpush1.bf16.msra.mxu0 %v956
        %990 = vmatprep.subr.bf16.mxu0 0
        %991 = vmatpush1.bf16.msra.mxu0 %v955
        %992 = vmatprep.subr.bf16.mxu0 0
        %993 = vmatpush2.bf16.msra.mxu0 0
        %994 = vmatprep.subr.bf16.mxu0 0
        %995 = vmatpush2.bf16.msra.mxu0 0
        %996 = vmatprep.subr.bf16.mxu0 0
        %997 = vmatpush2.bf16.msra.mxu0 0
        %998 = vmatprep.subr.bf16.mxu0 0
        %999 = vmatpush2.bf16.msra.mxu0 0
        %1000 = vmatprep.subr.bf16.mxu0 0
        %1001 = vmatpush2.bf16.msra.mxu0 0
        %1002 = vmatprep.subr.bf16.mxu0 0
        %1003 = vmatpush2.bf16.msra.mxu0 0
        %1004 = vmatprep.subr.bf16.mxu0 0
        %1005 = vmatpush2.bf16.msra.mxu0 0
        %1006 = vmatprep.subr.bf16.mxu0 0
        %1007 = vmatpush2.bf16.msra.mxu0 0
        %1008 = vmatprep.mubr.bf16.mxu0 0
        %1009 = vmatmul.mubr.bf16.gmra.mxu0 %v965
        %v1010 = vpop.f32.mrf.mxu0
        %v1011 = vadd.f32 0.0, %v1010
        %v1012 = vpop.f32.mrf.mxu0
        %v1013 = vpop.f32.mrf.mxu0
        %v1014 = vadd.f32 0.0, %v1013
        %v1015 = vpop.f32.mrf.mxu0
        %1016 = vmatprep.mubr.bf16.mxu0 0
        %1017 = vmatmul.mubr.bf16.gmra.mxu0 %v968
        %v1018 = vpop.f32.mrf.mxu0
        %v1019 = vadd.f32 0.0, %v1018
        %v1020 = vpop.f32.mrf.mxu0
        %v1021 = vpop.f32.mrf.mxu0
        %v1022 = vadd.f32 0.0, %v1021
        %v1023 = vpop.f32.mrf.mxu0
        %1024 = vmatprep.mubr.bf16.mxu0 0
        %1025 = vmatmul.mubr.bf16.gmra.mxu0 %v971
        %v1026 = vpop.f32.mrf.mxu0
        %v1027 = vadd.f32 0.0, %v1026
        %v1028 = vpop.f32.mrf.mxu0
        %v1029 = vpop.f32.mrf.mxu0
        %v1030 = vadd.f32 0.0, %v1029
        %v1031 = vpop.f32.mrf.mxu0
        %1032 = vmatprep.mubr.bf16.mxu0 0
        %1033 = vmatmul.mubr.bf16.gmra.mxu0 %v974
        %v1034 = vpop.f32.mrf.mxu0
        %v1035 = vadd.f32 0.0, %v1034
        %v1036 = vpop.f32.mrf.mxu0
        %v1037 = vpop.f32.mrf.mxu0
        %v1038 = vadd.f32 0.0, %v1037
        %v1039 = vpop.f32.mrf.mxu0
        %1040 = vdwg.mxu0
        %v1041 = vrot.slane %v1011, 2
        %v1042 = vrot.slane %v1014, 2
        %v1043 = vrot.slane %v1019, 2
        %v1044 = vrot.slane %v1022, 2
        %v1045 = vrot.slane %v1027, 2
        %v1046 = vrot.slane %v1030, 2
        %v1047 = vrot.slane %v1035, 2
        %v1048 = vrot.slane %v1038, 2
        %v1049 = vsel %vm629, %v1047, %v1048
        %v1050 = vsel %vm629, %v1046, %v1047
        %v1051 = vsel %vm629, %v1045, %v1046
        %v1052 = vsel %vm629, %v1044, %v1045
        %v1053 = vsel %vm629, %v1043, %v1044
        %v1054 = vsel %vm629, %v1042, %v1043
        %v1055 = vsel %vm629, %v1041, %v1042
        %v1056 = vsel %vm629, %v1048, %v1041
        %v1065 = vunpack.c.l.b16 %v922
        %v1066 = vunpack.c.l.b16 %v923
        %v1067 = vunpack.c.l.b16 %v924
        %v1068 = vunpack.c.l.b16 %v925
        %v1069 = vunpack.c.l.b16 %v926
        %v1070 = vunpack.c.l.b16 %v927
        %v1071 = vunpack.c.l.b16 %v928
        %v1072 = vunpack.c.l.b16 %v929
        %v1073 = vpack.c.b16 %v1066, %v1065
        %v1074 = vpack.c.b16 %v1068, %v1067
        %v1075 = vpack.c.b16 %v1070, %v1069
        %v1076 = vpack.c.b16 %v1072, %v1071
        %1081 = vmatprep.subr.bf16.mxu0 0
        %1082 = vmatpush1.bf16.msra.mxu0 0
        %1083 = vmatprep.subr.bf16.mxu0 0
        %1084 = vmatpush1.bf16.msra.mxu0 0
        %1085 = vmatprep.subr.bf16.mxu0 0
        %1086 = vmatpush1.bf16.msra.mxu0 0
        %1087 = vmatprep.subr.bf16.mxu0 0
        %1088 = vmatpush1.bf16.msra.mxu0 0
        %1089 = vmatprep.subr.bf16.mxu0 0
        %1090 = vmatpush1.bf16.msra.mxu0 %v1076
        %1091 = vmatprep.subr.bf16.mxu0 0
        %1092 = vmatpush1.bf16.msra.mxu0 %v1075
        %1093 = vmatprep.subr.bf16.mxu0 0
        %1094 = vmatpush1.bf16.msra.mxu0 %v1074
        %1095 = vmatprep.subr.bf16.mxu0 0
        %1096 = vmatpush1.bf16.msra.mxu0 %v1073
        %1097 = vmatprep.subr.bf16.mxu0 0
        %1098 = vmatpush2.bf16.msra.mxu0 0
        %1099 = vmatprep.subr.bf16.mxu0 0
        %1100 = vmatpush2.bf16.msra.mxu0 0
        %1101 = vmatprep.subr.bf16.mxu0 0
        %1102 = vmatpush2.bf16.msra.mxu0 0
        %1103 = vmatprep.subr.bf16.mxu0 0
        %1104 = vmatpush2.bf16.msra.mxu0 0
        %1105 = vmatprep.subr.bf16.mxu0 0
        %1106 = vmatpush2.bf16.msra.mxu0 0
        %1107 = vmatprep.subr.bf16.mxu0 0
        %1108 = vmatpush2.bf16.msra.mxu0 0
        %1109 = vmatprep.subr.bf16.mxu0 0
        %1110 = vmatpush2.bf16.msra.mxu0 0
        %1111 = vmatprep.subr.bf16.mxu0 0
        %1112 = vmatpush2.bf16.msra.mxu0 0
        %1113 = vmatprep.mubr.bf16.mxu0 0
        %1114 = vmatmul.mubr.bf16.gmra.mxu0 %v965
        %v1115 = vpop.f32.mrf.mxu0
        %v1116 = vadd.f32 %v1055, %v1115
        %v1117 = vpop.f32.mrf.mxu0
        %v1118 = vpop.f32.mrf.mxu0
        %v1119 = vadd.f32 %v1054, %v1118
        %v1120 = vpop.f32.mrf.mxu0
        %1121 = vmatprep.mubr.bf16.mxu0 0
        %1122 = vmatmul.mubr.bf16.gmra.mxu0 %v968
        %v1123 = vpop.f32.mrf.mxu0
        %v1124 = vadd.f32 %v1053, %v1123
        %v1125 = vpop.f32.mrf.mxu0
        %v1126 = vpop.f32.mrf.mxu0
        %v1127 = vadd.f32 %v1052, %v1126
        %v1128 = vpop.f32.mrf.mxu0
        %1129 = vmatprep.mubr.bf16.mxu0 0
        %1130 = vmatmul.mubr.bf16.gmra.mxu0 %v971
        %v1131 = vpop.f32.mrf.mxu0
        %v1132 = vadd.f32 %v1051, %v1131
        %v1133 = vpop.f32.mrf.mxu0
        %v1134 = vpop.f32.mrf.mxu0
        %v1135 = vadd.f32 %v1050, %v1134
        %v1136 = vpop.f32.mrf.mxu0
        %1137 = vmatprep.mubr.bf16.mxu0 0
        %1138 = vmatmul.mubr.bf16.gmra.mxu0 %v974
        %v1139 = vpop.f32.mrf.mxu0
        %v1140 = vadd.f32 %v1049, %v1139
        %v1141 = vpop.f32.mrf.mxu0
        %v1142 = vpop.f32.mrf.mxu0
        %v1143 = vadd.f32 %v1056, %v1142
        %v1144 = vpop.f32.mrf.mxu0
        %1145 = vdwg.mxu0
        %s1146 = scalar_lea.vmem %s2, 64
        %v1147 = vld [vmem:[%s1146] sm:$0xf]
        %v1148 = vld [vmem:[%s1146 + $0x4] sm:$0xf]
        %v1149 = vld [vmem:[%s1146 + $0x8] sm:$0xf]
        %v1150 = vld [vmem:[%s1146 + $0xc] sm:$0xf]
        %v1151 = vld [vmem:[%s1146 + $0x10] sm:$0xf]
        %v1152 = vld [vmem:[%s1146 + $0x14] sm:$0xf]
        %v1153 = vld [vmem:[%s1146 + $0x18] sm:$0xf]
        %v1154 = vld [vmem:[%s1146 + $0x1c] sm:$0xf]
        %v1163 = vunpack.c.l.b16 %v1147
        %v1164 = vunpack.c.l.b16 %v1148
        %v1165 = vunpack.c.l.b16 %v1149
        %v1166 = vunpack.c.l.b16 %v1150
        %v1167 = vunpack.c.l.b16 %v1151
        %v1168 = vunpack.c.l.b16 %v1152
        %v1169 = vunpack.c.l.b16 %v1153
        %v1170 = vunpack.c.l.b16 %v1154
        %v1171 = vpack.c.b16 %v1164, %v1163
        %v1172 = vpack.c.b16 %v1166, %v1165
        %v1173 = vpack.c.b16 %v1168, %v1167
        %v1174 = vpack.c.b16 %v1170, %v1169
        %1179 = vmatprep.subr.bf16.mxu0 0
        %1180 = vmatpush1.bf16.msra.mxu0 0
        %1181 = vmatprep.subr.bf16.mxu0 0
        %1182 = vmatpush1.bf16.msra.mxu0 0
        %1183 = vmatprep.subr.bf16.mxu0 0
        %1184 = vmatpush1.bf16.msra.mxu0 0
        %1185 = vmatprep.subr.bf16.mxu0 0
        %1186 = vmatpush1.bf16.msra.mxu0 0
        %1187 = vmatprep.subr.bf16.mxu0 0
        %1188 = vmatpush1.bf16.msra.mxu0 %v1174
        %1189 = vmatprep.subr.bf16.mxu0 0
        %1190 = vmatpush1.bf16.msra.mxu0 %v1173
        %1191 = vmatprep.subr.bf16.mxu0 0
        %1192 = vmatpush1.bf16.msra.mxu0 %v1172
        %1193 = vmatprep.subr.bf16.mxu0 0
        %1194 = vmatpush1.bf16.msra.mxu0 %v1171
        %1195 = vmatprep.subr.bf16.mxu0 0
        %1196 = vmatpush2.bf16.msra.mxu0 0
        %1197 = vmatprep.subr.bf16.mxu0 0
        %1198 = vmatpush2.bf16.msra.mxu0 0
        %1199 = vmatprep.subr.bf16.mxu0 0
        %1200 = vmatpush2.bf16.msra.mxu0 0
        %1201 = vmatprep.subr.bf16.mxu0 0
        %1202 = vmatpush2.bf16.msra.mxu0 0
        %1203 = vmatprep.subr.bf16.mxu0 0
        %1204 = vmatpush2.bf16.msra.mxu0 0
        %1205 = vmatprep.subr.bf16.mxu0 0
        %1206 = vmatpush2.bf16.msra.mxu0 0
        %1207 = vmatprep.subr.bf16.mxu0 0
        %1208 = vmatpush2.bf16.msra.mxu0 0
        %1209 = vmatprep.subr.bf16.mxu0 0
        %1210 = vmatpush2.bf16.msra.mxu0 0
        %1211 = vmatprep.mubr.bf16.mxu0 0
        %1212 = vmatmul.mubr.bf16.gmra.mxu0 %v965
        %v1213 = vpop.f32.mrf.mxu0
        %v1214 = vadd.f32 0.0, %v1213
        %v1215 = vpop.f32.mrf.mxu0
        %v1216 = vpop.f32.mrf.mxu0
        %v1217 = vadd.f32 0.0, %v1216
        %v1218 = vpop.f32.mrf.mxu0
        %1219 = vmatprep.mubr.bf16.mxu0 0
        %1220 = vmatmul.mubr.bf16.gmra.mxu0 %v968
        %v1221 = vpop.f32.mrf.mxu0
        %v1222 = vadd.f32 0.0, %v1221
        %v1223 = vpop.f32.mrf.mxu0
        %v1224 = vpop.f32.mrf.mxu0
        %v1225 = vadd.f32 0.0, %v1224
        %v1226 = vpop.f32.mrf.mxu0
        %1227 = vmatprep.mubr.bf16.mxu0 0
        %1228 = vmatmul.mubr.bf16.gmra.mxu0 %v971
        %v1229 = vpop.f32.mrf.mxu0
        %v1230 = vadd.f32 0.0, %v1229
        %v1231 = vpop.f32.mrf.mxu0
        %v1232 = vpop.f32.mrf.mxu0
        %v1233 = vadd.f32 0.0, %v1232
        %v1234 = vpop.f32.mrf.mxu0
        %1235 = vmatprep.mubr.bf16.mxu0 0
        %1236 = vmatmul.mubr.bf16.gmra.mxu0 %v974
        %v1237 = vpop.f32.mrf.mxu0
        %v1238 = vadd.f32 0.0, %v1237
        %v1239 = vpop.f32.mrf.mxu0
        %v1240 = vpop.f32.mrf.mxu0
        %v1241 = vadd.f32 0.0, %v1240
        %v1242 = vpop.f32.mrf.mxu0
        %1243 = vdwg.mxu0
        %v1244 = vrot.slane %v1214, 4
        %v1245 = vrot.slane %v1217, 4
        %v1246 = vrot.slane %v1222, 4
        %v1247 = vrot.slane %v1225, 4
        %v1248 = vrot.slane %v1230, 4
        %v1249 = vrot.slane %v1233, 4
        %v1250 = vrot.slane %v1238, 4
        %v1251 = vrot.slane %v1241, 4
        %v1252 = vsel %vm841, %v1250, %v1251
        %v1253 = vsel %vm841, %v1249, %v1250
        %v1254 = vsel %vm841, %v1248, %v1249
        %v1255 = vsel %vm841, %v1247, %v1248
        %v1256 = vsel %vm841, %v1246, %v1247
        %v1257 = vsel %vm841, %v1245, %v1246
        %v1258 = vsel %vm841, %v1244, %v1245
        %v1259 = vsel %vm841, %v1251, %v1244
        %v1260 = vadd.f32 %v1116, %v1258
        %v1261 = vadd.f32 %v1119, %v1257
        %v1262 = vadd.f32 %v1124, %v1256
        %v1263 = vadd.f32 %v1127, %v1255
        %v1264 = vadd.f32 %v1132, %v1254
        %v1265 = vadd.f32 %v1135, %v1253
        %v1266 = vadd.f32 %v1140, %v1252
        %v1267 = vadd.f32 %v1143, %v1259
        %v1268 = vld [vmem:[%s8 + $0x3] sm:$0x1]
        %v1269 = vld [vmem:[%s8 + $0x4] sm:$0x1]
        %v1270 = vld [vmem:[%s8 + $0x5] sm:$0x1]
        %v1271 = vlaneseq
        %v1272 = vshrl.u32 %v1271, 7
        %v1273 = vsub.s32 0, %v1272
        %v1274 = vrot.slane %v1268, %v1273
        %v1275 = vadd.f32 %v1260, %v1274
        %v1276 = vadd.f32 %v1261, %v1274
        %v1277 = vadd.f32 %v1262, %v1274
        %v1278 = vadd.f32 %v1263, %v1274
        %v1279 = vadd.f32 %v1264, %v1274
        %v1280 = vadd.f32 %v1265, %v1274
        %v1281 = vadd.f32 %v1266, %v1274
        %v1282 = vadd.f32 %v1267, %v1274
        %vm1283 = vcmp.ge.f32.partialorder %v1275, 0.0
        %vm1284 = vcmp.ge.f32.partialorder %v1276, 0.0
        %vm1285 = vcmp.ge.f32.partialorder %v1277, 0.0
        %vm1286 = vcmp.ge.f32.partialorder %v1278, 0.0
        %vm1287 = vcmp.ge.f32.partialorder %v1279, 0.0
        %vm1288 = vcmp.ge.f32.partialorder %v1280, 0.0
        %vm1289 = vcmp.ge.f32.partialorder %v1281, 0.0
        %vm1290 = vcmp.ge.f32.partialorder %v1282, 0.0
        %v1291 = vmul.f32 %v1269, 0.01
        %v1292 = vlaneseq
        %v1293 = vshrl.u32 %v1292, 7
        %v1294 = vsub.s32 0, %v1293
        %v1295 = vrot.slane %v1269, %v1294
        %v1296 = vlaneseq
        %v1297 = vshrl.u32 %v1296, 7
        %v1298 = vsub.s32 0, %v1297
        %v1299 = vrot.slane %v1291, %v1298
        %v1300 = vsel %vm1283, %v1295, %v1299
        %v1301 = vsel %vm1284, %v1295, %v1299
        %v1302 = vsel %vm1285, %v1295, %v1299
        %v1303 = vsel %vm1286, %v1295, %v1299
        %v1304 = vsel %vm1287, %v1295, %v1299
        %v1305 = vsel %vm1288, %v1295, %v1299
        %v1306 = vsel %vm1289, %v1295, %v1299
        %v1307 = vsel %vm1290, %v1295, %v1299
        %v1308 = vmul.f32 %v1275, %v1300
        %v1309 = vmul.f32 %v1276, %v1301
        %v1310 = vmul.f32 %v1277, %v1302
        %v1311 = vmul.f32 %v1278, %v1303
        %v1312 = vmul.f32 %v1279, %v1304
        %v1313 = vmul.f32 %v1280, %v1305
        %v1314 = vmul.f32 %v1281, %v1306
        %v1315 = vmul.f32 %v1282, %v1307
        %v1316 = vlaneseq
        %v1317 = vshrl.u32 %v1316, 7
        %v1318 = vsub.s32 0, %v1317
        %v1319 = vrot.slane %v1270, %v1318
        %v1320 = vadd.f32 %v1308, %v1319
        %v1321 = vadd.f32 %v1309, %v1319
        %v1322 = vadd.f32 %v1310, %v1319
        %v1323 = vadd.f32 %v1311, %v1319
        %v1324 = vadd.f32 %v1312, %v1319
        %v1325 = vadd.f32 %v1313, %v1319
        %v1326 = vadd.f32 %v1314, %v1319
        %v1327 = vadd.f32 %v1315, %v1319
        %v1328 = vpack.c.bf16 %v1321, %v1320
        %v1329 = vpack.c.bf16 %v1323, %v1322
        %v1330 = vpack.c.bf16 %v1325, %v1324
        %v1331 = vpack.c.bf16 %v1327, %v1326
        %v1332 = vld [vmem:[%s3] sm:$0xf]
        %v1333 = vld [vmem:[%s3 + $0x4] sm:$0xf]
        %v1334 = vld [vmem:[%s3 + $0x8] sm:$0xf]
        %v1335 = vld [vmem:[%s3 + $0xc] sm:$0xf]
        %v1336 = vld [vmem:[%s3 + $0x10] sm:$0xf]
        %v1337 = vld [vmem:[%s3 + $0x14] sm:$0xf]
        %v1338 = vld [vmem:[%s3 + $0x18] sm:$0xf]
        %v1339 = vld [vmem:[%s3 + $0x1c] sm:$0xf]
        %s1340 = scalar_lea.vmem %s3, 32
        %v1341 = vld [vmem:[%s1340] sm:$0xf]
        %v1342 = vld [vmem:[%s1340 + $0x4] sm:$0xf]
        %v1343 = vld [vmem:[%s1340 + $0x8] sm:$0xf]
        %v1344 = vld [vmem:[%s1340 + $0xc] sm:$0xf]
        %v1345 = vld [vmem:[%s1340 + $0x10] sm:$0xf]
        %v1346 = vld [vmem:[%s1340 + $0x14] sm:$0xf]
        %v1347 = vld [vmem:[%s1340 + $0x18] sm:$0xf]
        %v1348 = vld [vmem:[%s1340 + $0x1c] sm:$0xf]
        %v1357 = vunpack.c.l.b16 %v1341
        %v1358 = vunpack.c.l.b16 %v1342
        %v1359 = vunpack.c.l.b16 %v1343
        %v1360 = vunpack.c.l.b16 %v1344
        %v1361 = vunpack.c.l.b16 %v1345
        %v1362 = vunpack.c.l.b16 %v1346
        %v1363 = vunpack.c.l.b16 %v1347
        %v1364 = vunpack.c.l.b16 %v1348
        %v1365 = vpack.c.b16 %v1358, %v1357
        %v1366 = vpack.c.b16 %v1360, %v1359
        %v1367 = vpack.c.b16 %v1362, %v1361
        %v1368 = vpack.c.b16 %v1364, %v1363
        %v1374 = vsel %vm963, %v1328, 0
        %v1377 = vsel %vm963, %v1329, 0
        %v1380 = vsel %vm963, %v1330, 0
        %v1383 = vsel %vm963, %v1331, 0
        %1385 = vmatprep.subr.bf16.mxu0 0
        %1386 = vmatpush1.bf16.msra.mxu0 0
        %1387 = vmatprep.subr.bf16.mxu0 0
        %1388 = vmatpush1.bf16.msra.mxu0 0
        %1389 = vmatprep.subr.bf16.mxu0 0
        %1390 = vmatpush1.bf16.msra.mxu0 0
        %1391 = vmatprep.subr.bf16.mxu0 0
        %1392 = vmatpush1.bf16.msra.mxu0 0
        %1393 = vmatprep.subr.bf16.mxu0 0
        %1394 = vmatpush1.bf16.msra.mxu0 %v1368
        %1395 = vmatprep.subr.bf16.mxu0 0
        %1396 = vmatpush1.bf16.msra.mxu0 %v1367
        %1397 = vmatprep.subr.bf16.mxu0 0
        %1398 = vmatpush1.bf16.msra.mxu0 %v1366
        %1399 = vmatprep.subr.bf16.mxu0 0
        %1400 = vmatpush1.bf16.msra.mxu0 %v1365
        %1401 = vmatprep.subr.bf16.mxu0 0
        %1402 = vmatpush2.bf16.msra.mxu0 0
        %1403 = vmatprep.subr.bf16.mxu0 0
        %1404 = vmatpush2.bf16.msra.mxu0 0
        %1405 = vmatprep.subr.bf16.mxu0 0
        %1406 = vmatpush2.bf16.msra.mxu0 0
        %1407 = vmatprep.subr.bf16.mxu0 0
        %1408 = vmatpush2.bf16.msra.mxu0 0
        %1409 = vmatprep.subr.bf16.mxu0 0
        %1410 = vmatpush2.bf16.msra.mxu0 0
        %1411 = vmatprep.subr.bf16.mxu0 0
        %1412 = vmatpush2.bf16.msra.mxu0 0
        %1413 = vmatprep.subr.bf16.mxu0 0
        %1414 = vmatpush2.bf16.msra.mxu0 0
        %1415 = vmatprep.subr.bf16.mxu0 0
        %1416 = vmatpush2.bf16.msra.mxu0 0
        %1417 = vmatprep.mubr.bf16.mxu0 0
        %1418 = vmatmul.mubr.bf16.gmra.mxu0 %v1374
        %v1419 = vpop.f32.mrf.mxu0
        %v1420 = vadd.f32 0.0, %v1419
        %v1421 = vpop.f32.mrf.mxu0
        %v1422 = vpop.f32.mrf.mxu0
        %v1423 = vadd.f32 0.0, %v1422
        %v1424 = vpop.f32.mrf.mxu0
        %1425 = vmatprep.mubr.bf16.mxu0 0
        %1426 = vmatmul.mubr.bf16.gmra.mxu0 %v1377
        %v1427 = vpop.f32.mrf.mxu0
        %v1428 = vadd.f32 0.0, %v1427
        %v1429 = vpop.f32.mrf.mxu0
        %v1430 = vpop.f32.mrf.mxu0
        %v1431 = vadd.f32 0.0, %v1430
        %v1432 = vpop.f32.mrf.mxu0
        %1433 = vmatprep.mubr.bf16.mxu0 0
        %1434 = vmatmul.mubr.bf16.gmra.mxu0 %v1380
        %v1435 = vpop.f32.mrf.mxu0
        %v1436 = vadd.f32 0.0, %v1435
        %v1437 = vpop.f32.mrf.mxu0
        %v1438 = vpop.f32.mrf.mxu0
        %v1439 = vadd.f32 0.0, %v1438
        %v1440 = vpop.f32.mrf.mxu0
        %1441 = vmatprep.mubr.bf16.mxu0 0
        %1442 = vmatmul.mubr.bf16.gmra.mxu0 %v1383
        %v1443 = vpop.f32.mrf.mxu0
        %v1444 = vadd.f32 0.0, %v1443
        %v1445 = vpop.f32.mrf.mxu0
        %v1446 = vpop.f32.mrf.mxu0
        %v1447 = vadd.f32 0.0, %v1446
        %v1448 = vpop.f32.mrf.mxu0
        %1449 = vdwg.mxu0
        %v1450 = vrot.slane %v1420, 3
        %v1451 = vrot.slane %v1423, 3
        %v1452 = vrot.slane %v1428, 3
        %v1453 = vrot.slane %v1431, 3
        %v1454 = vrot.slane %v1436, 3
        %v1455 = vrot.slane %v1439, 3
        %v1456 = vrot.slane %v1444, 3
        %v1457 = vrot.slane %v1447, 3
        %v1458 = vsel %vm735, %v1456, %v1457
        %v1459 = vsel %vm735, %v1455, %v1456
        %v1460 = vsel %vm735, %v1454, %v1455
        %v1461 = vsel %vm735, %v1453, %v1454
        %v1462 = vsel %vm735, %v1452, %v1453
        %v1463 = vsel %vm735, %v1451, %v1452
        %v1464 = vsel %vm735, %v1450, %v1451
        %v1465 = vsel %vm735, %v1457, %v1450
        %v1474 = vunpack.c.l.b16 %v1332
        %v1475 = vunpack.c.l.b16 %v1333
        %v1476 = vunpack.c.l.b16 %v1334
        %v1477 = vunpack.c.l.b16 %v1335
        %v1478 = vunpack.c.l.b16 %v1336
        %v1479 = vunpack.c.l.b16 %v1337
        %v1480 = vunpack.c.l.b16 %v1338
        %v1481 = vunpack.c.l.b16 %v1339
        %v1482 = vpack.c.b16 %v1475, %v1474
        %v1483 = vpack.c.b16 %v1477, %v1476
        %v1484 = vpack.c.b16 %v1479, %v1478
        %v1485 = vpack.c.b16 %v1481, %v1480
        %1490 = vmatprep.subr.bf16.mxu0 0
        %1491 = vmatpush1.bf16.msra.mxu0 0
        %1492 = vmatprep.subr.bf16.mxu0 0
        %1493 = vmatpush1.bf16.msra.mxu0 0
        %1494 = vmatprep.subr.bf16.mxu0 0
        %1495 = vmatpush1.bf16.msra.mxu0 0
        %1496 = vmatprep.subr.bf16.mxu0 0
        %1497 = vmatpush1.bf16.msra.mxu0 0
        %1498 = vmatprep.subr.bf16.mxu0 0
        %1499 = vmatpush1.bf16.msra.mxu0 %v1485
        %1500 = vmatprep.subr.bf16.mxu0 0
        %1501 = vmatpush1.bf16.msra.mxu0 %v1484
        %1502 = vmatprep.subr.bf16.mxu0 0
        %1503 = vmatpush1.bf16.msra.mxu0 %v1483
        %1504 = vmatprep.subr.bf16.mxu0 0
        %1505 = vmatpush1.bf16.msra.mxu0 %v1482
        %1506 = vmatprep.subr.bf16.mxu0 0
        %1507 = vmatpush2.bf16.msra.mxu0 0
        %1508 = vmatprep.subr.bf16.mxu0 0
        %1509 = vmatpush2.bf16.msra.mxu0 0
        %1510 = vmatprep.subr.bf16.mxu0 0
        %1511 = vmatpush2.bf16.msra.mxu0 0
        %1512 = vmatprep.subr.bf16.mxu0 0
        %1513 = vmatpush2.bf16.msra.mxu0 0
        %1514 = vmatprep.subr.bf16.mxu0 0
        %1515 = vmatpush2.bf16.msra.mxu0 0
        %1516 = vmatprep.subr.bf16.mxu0 0
        %1517 = vmatpush2.bf16.msra.mxu0 0
        %1518 = vmatprep.subr.bf16.mxu0 0
        %1519 = vmatpush2.bf16.msra.mxu0 0
        %1520 = vmatprep.subr.bf16.mxu0 0
        %1521 = vmatpush2.bf16.msra.mxu0 0
        %1522 = vmatprep.mubr.bf16.mxu0 0
        %1523 = vmatmul.mubr.bf16.gmra.mxu0 %v1374
        %v1524 = vpop.f32.mrf.mxu0
        %v1525 = vadd.f32 %v1464, %v1524
        %v1526 = vpop.f32.mrf.mxu0
        %v1527 = vpop.f32.mrf.mxu0
        %v1528 = vadd.f32 %v1463, %v1527
        %v1529 = vpop.f32.mrf.mxu0
        %1530 = vmatprep.mubr.bf16.mxu0 0
        %1531 = vmatmul.mubr.bf16.gmra.mxu0 %v1377
        %v1532 = vpop.f32.mrf.mxu0
        %v1533 = vadd.f32 %v1462, %v1532
        %v1534 = vpop.f32.mrf.mxu0
        %v1535 = vpop.f32.mrf.mxu0
        %v1536 = vadd.f32 %v1461, %v1535
        %v1537 = vpop.f32.mrf.mxu0
        %1538 = vmatprep.mubr.bf16.mxu0 0
        %1539 = vmatmul.mubr.bf16.gmra.mxu0 %v1380
        %v1540 = vpop.f32.mrf.mxu0
        %v1541 = vadd.f32 %v1460, %v1540
        %v1542 = vpop.f32.mrf.mxu0
        %v1543 = vpop.f32.mrf.mxu0
        %v1544 = vadd.f32 %v1459, %v1543
        %v1545 = vpop.f32.mrf.mxu0
        %1546 = vmatprep.mubr.bf16.mxu0 0
        %1547 = vmatmul.mubr.bf16.gmra.mxu0 %v1383
        %v1548 = vpop.f32.mrf.mxu0
        %v1549 = vadd.f32 %v1458, %v1548
        %v1550 = vpop.f32.mrf.mxu0
        %v1551 = vpop.f32.mrf.mxu0
        %v1552 = vadd.f32 %v1465, %v1551
        %v1553 = vpop.f32.mrf.mxu0
        %1554 = vdwg.mxu0
        %s1555 = scalar_lea.vmem %s3, 64
        %v1556 = vld [vmem:[%s1555] sm:$0xf]
        %v1557 = vld [vmem:[%s1555 + $0x4] sm:$0xf]
        %v1558 = vld [vmem:[%s1555 + $0x8] sm:$0xf]
        %v1559 = vld [vmem:[%s1555 + $0xc] sm:$0xf]
        %v1560 = vld [vmem:[%s1555 + $0x10] sm:$0xf]
        %v1561 = vld [vmem:[%s1555 + $0x14] sm:$0xf]
        %v1562 = vld [vmem:[%s1555 + $0x18] sm:$0xf]
        %v1563 = vld [vmem:[%s1555 + $0x1c] sm:$0xf]
        %v1572 = vunpack.c.l.b16 %v1556
        %v1573 = vunpack.c.l.b16 %v1557
        %v1574 = vunpack.c.l.b16 %v1558
        %v1575 = vunpack.c.l.b16 %v1559
        %v1576 = vunpack.c.l.b16 %v1560
        %v1577 = vunpack.c.l.b16 %v1561
        %v1578 = vunpack.c.l.b16 %v1562
        %v1579 = vunpack.c.l.b16 %v1563
        %v1580 = vpack.c.b16 %v1573, %v1572
        %v1581 = vpack.c.b16 %v1575, %v1574
        %v1582 = vpack.c.b16 %v1577, %v1576
        %v1583 = vpack.c.b16 %v1579, %v1578
        %1588 = vmatprep.subr.bf16.mxu0 0
        %1589 = vmatpush1.bf16.msra.mxu0 0
        %1590 = vmatprep.subr.bf16.mxu0 0
        %1591 = vmatpush1.bf16.msra.mxu0 0
        %1592 = vmatprep.subr.bf16.mxu0 0
        %1593 = vmatpush1.bf16.msra.mxu0 0
        %1594 = vmatprep.subr.bf16.mxu0 0
        %1595 = vmatpush1.bf16.msra.mxu0 0
        %1596 = vmatprep.subr.bf16.mxu0 0
        %1597 = vmatpush1.bf16.msra.mxu0 %v1583
        %1598 = vmatprep.subr.bf16.mxu0 0
        %1599 = vmatpush1.bf16.msra.mxu0 %v1582
        %1600 = vmatprep.subr.bf16.mxu0 0
        %1601 = vmatpush1.bf16.msra.mxu0 %v1581
        %1602 = vmatprep.subr.bf16.mxu0 0
        %1603 = vmatpush1.bf16.msra.mxu0 %v1580
        %1604 = vmatprep.subr.bf16.mxu0 0
        %1605 = vmatpush2.bf16.msra.mxu0 0
        %1606 = vmatprep.subr.bf16.mxu0 0
        %1607 = vmatpush2.bf16.msra.mxu0 0
        %1608 = vmatprep.subr.bf16.mxu0 0
        %1609 = vmatpush2.bf16.msra.mxu0 0
        %1610 = vmatprep.subr.bf16.mxu0 0
        %1611 = vmatpush2.bf16.msra.mxu0 0
        %1612 = vmatprep.subr.bf16.mxu0 0
        %1613 = vmatpush2.bf16.msra.mxu0 0
        %1614 = vmatprep.subr.bf16.mxu0 0
        %1615 = vmatpush2.bf16.msra.mxu0 0
        %1616 = vmatprep.subr.bf16.mxu0 0
        %1617 = vmatpush2.bf16.msra.mxu0 0
        %1618 = vmatprep.subr.bf16.mxu0 0
        %1619 = vmatpush2.bf16.msra.mxu0 0
        %1620 = vmatprep.mubr.bf16.mxu0 0
        %1621 = vmatmul.mubr.bf16.gmra.mxu0 %v1374
        %v1622 = vpop.f32.mrf.mxu0
        %v1623 = vadd.f32 0.0, %v1622
        %v1624 = vpop.f32.mrf.mxu0
        %v1625 = vpop.f32.mrf.mxu0
        %v1626 = vadd.f32 0.0, %v1625
        %v1627 = vpop.f32.mrf.mxu0
        %1628 = vmatprep.mubr.bf16.mxu0 0
        %1629 = vmatmul.mubr.bf16.gmra.mxu0 %v1377
        %v1630 = vpop.f32.mrf.mxu0
        %v1631 = vadd.f32 0.0, %v1630
        %v1632 = vpop.f32.mrf.mxu0
        %v1633 = vpop.f32.mrf.mxu0
        %v1634 = vadd.f32 0.0, %v1633
        %v1635 = vpop.f32.mrf.mxu0
        %1636 = vmatprep.mubr.bf16.mxu0 0
        %1637 = vmatmul.mubr.bf16.gmra.mxu0 %v1380
        %v1638 = vpop.f32.mrf.mxu0
        %v1639 = vadd.f32 0.0, %v1638
        %v1640 = vpop.f32.mrf.mxu0
        %v1641 = vpop.f32.mrf.mxu0
        %v1642 = vadd.f32 0.0, %v1641
        %v1643 = vpop.f32.mrf.mxu0
        %1644 = vmatprep.mubr.bf16.mxu0 0
        %1645 = vmatmul.mubr.bf16.gmra.mxu0 %v1383
        %v1646 = vpop.f32.mrf.mxu0
        %v1647 = vadd.f32 0.0, %v1646
        %v1648 = vpop.f32.mrf.mxu0
        %v1649 = vpop.f32.mrf.mxu0
        %v1650 = vadd.f32 0.0, %v1649
        %v1651 = vpop.f32.mrf.mxu0
        %1652 = vdwg.mxu0
        %v1653 = vrot.slane %v1623, 6
        %v1654 = vrot.slane %v1626, 6
        %v1655 = vrot.slane %v1631, 6
        %v1656 = vrot.slane %v1634, 6
        %v1657 = vrot.slane %v1639, 6
        %v1658 = vrot.slane %v1642, 6
        %v1659 = vrot.slane %v1647, 6
        %v1660 = vrot.slane %v1650, 6
        %vm1661 = vcmp.lt.s32.totalorder %v453, 2
        %v1662 = vsel %vm1661, %v1659, %v1660
        %v1663 = vsel %vm1661, %v1658, %v1659
        %v1664 = vsel %vm1661, %v1657, %v1658
        %v1665 = vsel %vm1661, %v1656, %v1657
        %v1666 = vsel %vm1661, %v1655, %v1656
        %v1667 = vsel %vm1661, %v1654, %v1655
        %v1668 = vsel %vm1661, %v1653, %v1654
        %v1669 = vsel %vm1661, %v1660, %v1653
        %v1670 = vadd.f32 %v1525, %v1668
        %v1671 = vadd.f32 %v1528, %v1667
        %v1672 = vadd.f32 %v1533, %v1666
        %v1673 = vadd.f32 %v1536, %v1665
        %v1674 = vadd.f32 %v1541, %v1664
        %v1675 = vadd.f32 %v1544, %v1663
        %v1676 = vadd.f32 %v1549, %v1662
        %v1677 = vadd.f32 %v1552, %v1669
        %v1678 = vld [vmem:[%s8 + $0x6] sm:$0x1]
        %v1679 = vld [vmem:[%s8 + $0x7] sm:$0x1]
        %v1680 = vld [vmem:[%s8 + $0x8] sm:$0x1]
        %v1681 = vlaneseq
        %v1682 = vshrl.u32 %v1681, 7
        %v1683 = vsub.s32 0, %v1682
        %v1684 = vrot.slane %v1678, %v1683
        %v1685 = vadd.f32 %v1670, %v1684
        %v1686 = vadd.f32 %v1671, %v1684
        %v1687 = vadd.f32 %v1672, %v1684
        %v1688 = vadd.f32 %v1673, %v1684
        %v1689 = vadd.f32 %v1674, %v1684
        %v1690 = vadd.f32 %v1675, %v1684
        %v1691 = vadd.f32 %v1676, %v1684
        %v1692 = vadd.f32 %v1677, %v1684
        %vm1693 = vcmp.ge.f32.partialorder %v1685, 0.0
        %vm1694 = vcmp.ge.f32.partialorder %v1686, 0.0
        %vm1695 = vcmp.ge.f32.partialorder %v1687, 0.0
        %vm1696 = vcmp.ge.f32.partialorder %v1688, 0.0
        %vm1697 = vcmp.ge.f32.partialorder %v1689, 0.0
        %vm1698 = vcmp.ge.f32.partialorder %v1690, 0.0
        %vm1699 = vcmp.ge.f32.partialorder %v1691, 0.0
        %vm1700 = vcmp.ge.f32.partialorder %v1692, 0.0
        %v1701 = vmul.f32 %v1679, 0.01
        %v1702 = vlaneseq
        %v1703 = vshrl.u32 %v1702, 7
        %v1704 = vsub.s32 0, %v1703
        %v1705 = vrot.slane %v1679, %v1704
        %v1706 = vlaneseq
        %v1707 = vshrl.u32 %v1706, 7
        %v1708 = vsub.s32 0, %v1707
        %v1709 = vrot.slane %v1701, %v1708
        %v1710 = vsel %vm1693, %v1705, %v1709
        %v1711 = vsel %vm1694, %v1705, %v1709
        %v1712 = vsel %vm1695, %v1705, %v1709
        %v1713 = vsel %vm1696, %v1705, %v1709
        %v1714 = vsel %vm1697, %v1705, %v1709
        %v1715 = vsel %vm1698, %v1705, %v1709
        %v1716 = vsel %vm1699, %v1705, %v1709
        %v1717 = vsel %vm1700, %v1705, %v1709
        %v1718 = vmul.f32 %v1685, %v1710
        %v1719 = vmul.f32 %v1686, %v1711
        %v1720 = vmul.f32 %v1687, %v1712
        %v1721 = vmul.f32 %v1688, %v1713
        %v1722 = vmul.f32 %v1689, %v1714
        %v1723 = vmul.f32 %v1690, %v1715
        %v1724 = vmul.f32 %v1691, %v1716
        %v1725 = vmul.f32 %v1692, %v1717
        %v1726 = vlaneseq
        %v1727 = vshrl.u32 %v1726, 7
        %v1728 = vsub.s32 0, %v1727
        %v1729 = vrot.slane %v1680, %v1728
        %v1730 = vadd.f32 %v1718, %v1729
        %v1731 = vadd.f32 %v1719, %v1729
        %v1732 = vadd.f32 %v1720, %v1729
        %v1733 = vadd.f32 %v1721, %v1729
        %v1734 = vadd.f32 %v1722, %v1729
        %v1735 = vadd.f32 %v1723, %v1729
        %v1736 = vadd.f32 %v1724, %v1729
        %v1737 = vadd.f32 %v1725, %v1729
        %v1738 = vpack.c.bf16 %v1731, %v1730
        %v1739 = vpack.c.bf16 %v1733, %v1732
        %v1740 = vpack.c.bf16 %v1735, %v1734
        %v1741 = vpack.c.bf16 %v1737, %v1736
        %v1742 = vld [vmem:[%s4] sm:$0xf]
        %v1743 = vld [vmem:[%s4 + $0x4] sm:$0xf]
        %v1744 = vld [vmem:[%s4 + $0x8] sm:$0xf]
        %v1745 = vld [vmem:[%s4 + $0xc] sm:$0xf]
        %v1746 = vld [vmem:[%s4 + $0x10] sm:$0xf]
        %v1747 = vld [vmem:[%s4 + $0x14] sm:$0xf]
        %v1748 = vld [vmem:[%s4 + $0x18] sm:$0xf]
        %v1749 = vld [vmem:[%s4 + $0x1c] sm:$0xf]
        %v1750 = vld [vmem:[%s8 + $0x9] sm:$0x1]
        %v1751 = vld [vmem:[%s8 + $0xa] sm:$0x1]
        %v1752 = vld [vmem:[%s8 + $0xb] sm:$0x1]
        %v1753 = vlaneseq
        %v1754 = vshrl.u32 %v1753, 7
        %v1755 = vsub.s32 0, %v1754
        %v1756 = vrot.slane %v1750, %v1755
        %v1765 = vunpack.c.l.b16 %v1742
        %v1766 = vunpack.c.l.b16 %v1743
        %v1767 = vunpack.c.l.b16 %v1744
        %v1768 = vunpack.c.l.b16 %v1745
        %v1769 = vunpack.c.l.b16 %v1746
        %v1770 = vunpack.c.l.b16 %v1747
        %v1771 = vunpack.c.l.b16 %v1748
        %v1772 = vunpack.c.l.b16 %v1749
        %v1773 = vpack.c.b16 %v1766, %v1765
        %v1774 = vpack.c.b16 %v1768, %v1767
        %v1775 = vpack.c.b16 %v1770, %v1769
        %v1776 = vpack.c.b16 %v1772, %v1771
        %v1782 = vsel %vm963, %v1738, 0
        %v1785 = vsel %vm963, %v1739, 0
        %v1788 = vsel %vm963, %v1740, 0
        %v1791 = vsel %vm963, %v1741, 0
        %1793 = vmatprep.subr.bf16.mxu0 0
        %1794 = vmatpush1.bf16.msra.mxu0 0
        %1795 = vmatprep.subr.bf16.mxu0 0
        %1796 = vmatpush1.bf16.msra.mxu0 0
        %1797 = vmatprep.subr.bf16.mxu0 0
        %1798 = vmatpush1.bf16.msra.mxu0 0
        %1799 = vmatprep.subr.bf16.mxu0 0
        %1800 = vmatpush1.bf16.msra.mxu0 0
        %1801 = vmatprep.subr.bf16.mxu0 0
        %1802 = vmatpush1.bf16.msra.mxu0 %v1776
        %1803 = vmatprep.subr.bf16.mxu0 0
        %1804 = vmatpush1.bf16.msra.mxu0 %v1775
        %1805 = vmatprep.subr.bf16.mxu0 0
        %1806 = vmatpush1.bf16.msra.mxu0 %v1774
        %1807 = vmatprep.subr.bf16.mxu0 0
        %1808 = vmatpush1.bf16.msra.mxu0 %v1773
        %1809 = vmatprep.subr.bf16.mxu0 0
        %1810 = vmatpush2.bf16.msra.mxu0 0
        %1811 = vmatprep.subr.bf16.mxu0 0
        %1812 = vmatpush2.bf16.msra.mxu0 0
        %1813 = vmatprep.subr.bf16.mxu0 0
        %1814 = vmatpush2.bf16.msra.mxu0 0
        %1815 = vmatprep.subr.bf16.mxu0 0
        %1816 = vmatpush2.bf16.msra.mxu0 0
        %1817 = vmatprep.subr.bf16.mxu0 0
        %1818 = vmatpush2.bf16.msra.mxu0 0
        %1819 = vmatprep.subr.bf16.mxu0 0
        %1820 = vmatpush2.bf16.msra.mxu0 0
        %1821 = vmatprep.subr.bf16.mxu0 0
        %1822 = vmatpush2.bf16.msra.mxu0 0
        %1823 = vmatprep.subr.bf16.mxu0 0
        %1824 = vmatpush2.bf16.msra.mxu0 0
        %1825 = vmatprep.mubr.bf16.mxu0 0
        %1826 = vmatmul.mubr.bf16.gmra.mxu0 %v1782
        %v1827 = vpop.f32.mrf.mxu0
        %v1828 = vadd.f32 %v1756, %v1827
        %v1829 = vpop.f32.mrf.mxu0
        %v1830 = vpop.f32.mrf.mxu0
        %v1831 = vadd.f32 %v1756, %v1830
        %v1832 = vpop.f32.mrf.mxu0
        %1833 = vmatprep.mubr.bf16.mxu0 0
        %1834 = vmatmul.mubr.bf16.gmra.mxu0 %v1785
        %v1835 = vpop.f32.mrf.mxu0
        %v1836 = vadd.f32 %v1756, %v1835
        %v1837 = vpop.f32.mrf.mxu0
        %v1838 = vpop.f32.mrf.mxu0
        %v1839 = vadd.f32 %v1756, %v1838
        %v1840 = vpop.f32.mrf.mxu0
        %1841 = vmatprep.mubr.bf16.mxu0 0
        %1842 = vmatmul.mubr.bf16.gmra.mxu0 %v1788
        %v1843 = vpop.f32.mrf.mxu0
        %v1844 = vadd.f32 %v1756, %v1843
        %v1845 = vpop.f32.mrf.mxu0
        %v1846 = vpop.f32.mrf.mxu0
        %v1847 = vadd.f32 %v1756, %v1846
        %v1848 = vpop.f32.mrf.mxu0
        %1849 = vmatprep.mubr.bf16.mxu0 0
        %1850 = vmatmul.mubr.bf16.gmra.mxu0 %v1791
        %v1851 = vpop.f32.mrf.mxu0
        %v1852 = vadd.f32 %v1756, %v1851
        %v1853 = vpop.f32.mrf.mxu0
        %v1854 = vpop.f32.mrf.mxu0
        %v1855 = vadd.f32 %v1756, %v1854
        %v1856 = vpop.f32.mrf.mxu0
        %1857 = vdwg.mxu0
        %vm1858 = vcmp.ge.f32.partialorder %v1828, 0.0
        %vm1859 = vcmp.ge.f32.partialorder %v1831, 0.0
        %vm1860 = vcmp.ge.f32.partialorder %v1836, 0.0
        %vm1861 = vcmp.ge.f32.partialorder %v1839, 0.0
        %vm1862 = vcmp.ge.f32.partialorder %v1844, 0.0
        %vm1863 = vcmp.ge.f32.partialorder %v1847, 0.0
        %vm1864 = vcmp.ge.f32.partialorder %v1852, 0.0
        %vm1865 = vcmp.ge.f32.partialorder %v1855, 0.0
        %v1866 = vmul.f32 %v1751, 0.01
        %v1867 = vlaneseq
        %v1868 = vshrl.u32 %v1867, 7
        %v1869 = vsub.s32 0, %v1868
        %v1870 = vrot.slane %v1751, %v1869
        %v1871 = vlaneseq
        %v1872 = vshrl.u32 %v1871, 7
        %v1873 = vsub.s32 0, %v1872
        %v1874 = vrot.slane %v1866, %v1873
        %v1875 = vsel %vm1858, %v1870, %v1874
        %v1876 = vsel %vm1859, %v1870, %v1874
        %v1877 = vsel %vm1860, %v1870, %v1874
        %v1878 = vsel %vm1861, %v1870, %v1874
        %v1879 = vsel %vm1862, %v1870, %v1874
        %v1880 = vsel %vm1863, %v1870, %v1874
        %v1881 = vsel %vm1864, %v1870, %v1874
        %v1882 = vsel %vm1865, %v1870, %v1874
        %v1883 = vmul.f32 %v1828, %v1875
        %v1884 = vmul.f32 %v1831, %v1876
        %v1885 = vmul.f32 %v1836, %v1877
        %v1886 = vmul.f32 %v1839, %v1878
        %v1887 = vmul.f32 %v1844, %v1879
        %v1888 = vmul.f32 %v1847, %v1880
        %v1889 = vmul.f32 %v1852, %v1881
        %v1890 = vmul.f32 %v1855, %v1882
        %v1891 = vlaneseq
        %v1892 = vshrl.u32 %v1891, 7
        %v1893 = vsub.s32 0, %v1892
        %v1894 = vrot.slane %v1752, %v1893
        %v1895 = vadd.f32 %v1883, %v1894
        %v1896 = vadd.f32 %v1884, %v1894
        %v1897 = vadd.f32 %v1885, %v1894
        %v1898 = vadd.f32 %v1886, %v1894
        %v1899 = vadd.f32 %v1887, %v1894
        %v1900 = vadd.f32 %v1888, %v1894
        %v1901 = vadd.f32 %v1889, %v1894
        %v1902 = vadd.f32 %v1890, %v1894
        %v1903 = vpack.c.bf16 %v1896, %v1895
        %v1904 = vpack.c.bf16 %v1898, %v1897
        %v1905 = vpack.c.bf16 %v1900, %v1899
        %v1906 = vpack.c.bf16 %v1902, %v1901
        %v1907 = vld [vmem:[%s5] sm:$0xf]
        %v1908 = vld [vmem:[%s5 + $0x4] sm:$0xf]
        %v1909 = vld [vmem:[%s5 + $0x8] sm:$0xf]
        %v1910 = vld [vmem:[%s5 + $0xc] sm:$0xf]
        %v1911 = vld [vmem:[%s5 + $0x10] sm:$0xf]
        %v1912 = vld [vmem:[%s5 + $0x14] sm:$0xf]
        %v1913 = vld [vmem:[%s5 + $0x18] sm:$0xf]
        %v1914 = vld [vmem:[%s5 + $0x1c] sm:$0xf]
        %v1915 = vld [vmem:[%s8 + $0xc] sm:$0x1]
        %v1916 = vld [vmem:[%s8 + $0xd] sm:$0x1]
        %v1917 = vld [vmem:[%s8 + $0xe] sm:$0x1]
        %v1918 = vlaneseq
        %v1919 = vshrl.u32 %v1918, 7
        %v1920 = vsub.s32 0, %v1919
        %v1921 = vrot.slane %v1915, %v1920
        %v1930 = vunpack.c.l.b16 %v1907
        %v1931 = vunpack.c.l.b16 %v1908
        %v1932 = vunpack.c.l.b16 %v1909
        %v1933 = vunpack.c.l.b16 %v1910
        %v1934 = vunpack.c.l.b16 %v1911
        %v1935 = vunpack.c.l.b16 %v1912
        %v1936 = vunpack.c.l.b16 %v1913
        %v1937 = vunpack.c.l.b16 %v1914
        %v1938 = vpack.c.b16 %v1931, %v1930
        %v1939 = vpack.c.b16 %v1933, %v1932
        %v1940 = vpack.c.b16 %v1935, %v1934
        %v1941 = vpack.c.b16 %v1937, %v1936
        %v1947 = vsel %vm963, %v1903, 0
        %v1950 = vsel %vm963, %v1904, 0
        %v1953 = vsel %vm963, %v1905, 0
        %v1956 = vsel %vm963, %v1906, 0
        %1958 = vmatprep.subr.bf16.mxu0 0
        %1959 = vmatpush1.bf16.msra.mxu0 0
        %1960 = vmatprep.subr.bf16.mxu0 0
        %1961 = vmatpush1.bf16.msra.mxu0 0
        %1962 = vmatprep.subr.bf16.mxu0 0
        %1963 = vmatpush1.bf16.msra.mxu0 0
        %1964 = vmatprep.subr.bf16.mxu0 0
        %1965 = vmatpush1.bf16.msra.mxu0 0
        %1966 = vmatprep.subr.bf16.mxu0 0
        %1967 = vmatpush1.bf16.msra.mxu0 %v1941
        %1968 = vmatprep.subr.bf16.mxu0 0
        %1969 = vmatpush1.bf16.msra.mxu0 %v1940
        %1970 = vmatprep.subr.bf16.mxu0 0
        %1971 = vmatpush1.bf16.msra.mxu0 %v1939
        %1972 = vmatprep.subr.bf16.mxu0 0
        %1973 = vmatpush1.bf16.msra.mxu0 %v1938
        %1974 = vmatprep.subr.bf16.mxu0 0
        %1975 = vmatpush2.bf16.msra.mxu0 0
        %1976 = vmatprep.subr.bf16.mxu0 0
        %1977 = vmatpush2.bf16.msra.mxu0 0
        %1978 = vmatprep.subr.bf16.mxu0 0
        %1979 = vmatpush2.bf16.msra.mxu0 0
        %1980 = vmatprep.subr.bf16.mxu0 0
        %1981 = vmatpush2.bf16.msra.mxu0 0
        %1982 = vmatprep.subr.bf16.mxu0 0
        %1983 = vmatpush2.bf16.msra.mxu0 0
        %1984 = vmatprep.subr.bf16.mxu0 0
        %1985 = vmatpush2.bf16.msra.mxu0 0
        %1986 = vmatprep.subr.bf16.mxu0 0
        %1987 = vmatpush2.bf16.msra.mxu0 0
        %1988 = vmatprep.subr.bf16.mxu0 0
        %1989 = vmatpush2.bf16.msra.mxu0 0
        %1990 = vmatprep.mubr.bf16.mxu0 0
        %1991 = vmatmul.mubr.bf16.gmra.mxu0 %v1947
        %v1992 = vpop.f32.mrf.mxu0
        %v1993 = vadd.f32 %v1921, %v1992
        %v1994 = vpop.f32.mrf.mxu0
        %v1995 = vpop.f32.mrf.mxu0
        %v1996 = vadd.f32 %v1921, %v1995
        %v1997 = vpop.f32.mrf.mxu0
        %1998 = vmatprep.mubr.bf16.mxu0 0
        %1999 = vmatmul.mubr.bf16.gmra.mxu0 %v1950
        %v2000 = vpop.f32.mrf.mxu0
        %v2001 = vadd.f32 %v1921, %v2000
        %v2002 = vpop.f32.mrf.mxu0
        %v2003 = vpop.f32.mrf.mxu0
        %v2004 = vadd.f32 %v1921, %v2003
        %v2005 = vpop.f32.mrf.mxu0
        %2006 = vmatprep.mubr.bf16.mxu0 0
        %2007 = vmatmul.mubr.bf16.gmra.mxu0 %v1953
        %v2008 = vpop.f32.mrf.mxu0
        %v2009 = vadd.f32 %v1921, %v2008
        %v2010 = vpop.f32.mrf.mxu0
        %v2011 = vpop.f32.mrf.mxu0
        %v2012 = vadd.f32 %v1921, %v2011
        %v2013 = vpop.f32.mrf.mxu0
        %2014 = vmatprep.mubr.bf16.mxu0 0
        %2015 = vmatmul.mubr.bf16.gmra.mxu0 %v1956
        %v2016 = vpop.f32.mrf.mxu0
        %v2017 = vadd.f32 %v1921, %v2016
        %v2018 = vpop.f32.mrf.mxu0
        %v2019 = vpop.f32.mrf.mxu0
        %v2020 = vadd.f32 %v1921, %v2019
        %v2021 = vpop.f32.mrf.mxu0
        %2022 = vdwg.mxu0
        %vm2023 = vcmp.ge.f32.partialorder %v1993, 0.0
        %vm2024 = vcmp.ge.f32.partialorder %v1996, 0.0
        %vm2025 = vcmp.ge.f32.partialorder %v2001, 0.0
        %vm2026 = vcmp.ge.f32.partialorder %v2004, 0.0
        %vm2027 = vcmp.ge.f32.partialorder %v2009, 0.0
        %vm2028 = vcmp.ge.f32.partialorder %v2012, 0.0
        %vm2029 = vcmp.ge.f32.partialorder %v2017, 0.0
        %vm2030 = vcmp.ge.f32.partialorder %v2020, 0.0
        %v2031 = vmul.f32 %v1916, 0.01
        %v2032 = vlaneseq
        %v2033 = vshrl.u32 %v2032, 7
        %v2034 = vsub.s32 0, %v2033
        %v2035 = vrot.slane %v1916, %v2034
        %v2036 = vlaneseq
        %v2037 = vshrl.u32 %v2036, 7
        %v2038 = vsub.s32 0, %v2037
        %v2039 = vrot.slane %v2031, %v2038
        %v2040 = vsel %vm2023, %v2035, %v2039
        %v2041 = vsel %vm2024, %v2035, %v2039
        %v2042 = vsel %vm2025, %v2035, %v2039
        %v2043 = vsel %vm2026, %v2035, %v2039
        %v2044 = vsel %vm2027, %v2035, %v2039
        %v2045 = vsel %vm2028, %v2035, %v2039
        %v2046 = vsel %vm2029, %v2035, %v2039
        %v2047 = vsel %vm2030, %v2035, %v2039
        %v2048 = vmul.f32 %v1993, %v2040
        %v2049 = vmul.f32 %v1996, %v2041
        %v2050 = vmul.f32 %v2001, %v2042
        %v2051 = vmul.f32 %v2004, %v2043
        %v2052 = vmul.f32 %v2009, %v2044
        %v2053 = vmul.f32 %v2012, %v2045
        %v2054 = vmul.f32 %v2017, %v2046
        %v2055 = vmul.f32 %v2020, %v2047
        %v2056 = vlaneseq
        %v2057 = vshrl.u32 %v2056, 7
        %v2058 = vsub.s32 0, %v2057
        %v2059 = vrot.slane %v1917, %v2058
        %v2060 = vadd.f32 %v2048, %v2059
        %v2061 = vadd.f32 %v2049, %v2059
        %v2062 = vadd.f32 %v2050, %v2059
        %v2063 = vadd.f32 %v2051, %v2059
        %v2064 = vadd.f32 %v2052, %v2059
        %v2065 = vadd.f32 %v2053, %v2059
        %v2066 = vadd.f32 %v2054, %v2059
        %v2067 = vadd.f32 %v2055, %v2059
        %v2068 = vlaneseq
        %v2069 = vand.u32 %v2068, 127
        %v2070 = vmul.u32 %v453, 32
        %vm2071 = vcmp.ge.s32.totalorder %v2069, %v2070
        %v2072 = vadd.s32 %v2070, 18
        %vm2073 = vcmp.lt.s32.totalorder %v2069, %v2072
        %vm2074 = vmand %vm2071, %vm2073
        %v2075 = vsel %vm2074, 1, 0
        %v2076 = vcvt.s32.f32 %v2075
        %v2078 = vsel %vm963, %v2076, 0
        %2080 = vmatprep.subr.mxu0 0.0
        %2081 = vmatpush1.msra.mxu0 0.0
        %2082 = vmatprep.subr.mxu0 0.0
        %2083 = vmatpush1.msra.mxu0 0.0
        %2084 = vmatprep.subr.mxu0 0.0
        %2085 = vmatpush1.msra.mxu0 0.0
        %2086 = vmatprep.subr.mxu0 0.0
        %2087 = vmatpush1.msra.mxu0 0.0
        %2088 = vmatprep.subr.mxu0 0.0
        %2089 = vmatpush1.msra.mxu0 0.0
        %2090 = vmatprep.subr.mxu0 0.0
        %2091 = vmatpush1.msra.mxu0 0.0
        %2092 = vmatprep.subr.mxu0 0.0
        %2093 = vmatpush1.msra.mxu0 0.0
        %2094 = vmatprep.subr.mxu0 0.0
        %2095 = vmatpush1.msra.mxu0 0.0
        %2096 = vmatprep.subr.mxu0 0.0
        %2097 = vmatpush1.msra.mxu0 %v2067
        %2098 = vmatprep.subr.mxu0 0.0
        %2099 = vmatpush1.msra.mxu0 %v2066
        %2100 = vmatprep.subr.mxu0 0.0
        %2101 = vmatpush1.msra.mxu0 %v2065
        %2102 = vmatprep.subr.mxu0 0.0
        %2103 = vmatpush1.msra.mxu0 %v2064
        %2104 = vmatprep.subr.mxu0 0.0
        %2105 = vmatpush1.msra.mxu0 %v2063
        %2106 = vmatprep.subr.mxu0 0.0
        %2107 = vmatpush1.msra.mxu0 %v2062
        %2108 = vmatprep.subr.mxu0 0.0
        %2109 = vmatpush1.msra.mxu0 %v2061
        %2110 = vmatprep.subr.mxu0 0.0
        %2111 = vmatpush1.msra.mxu0 %v2060
        %2112 = vmatprep.subr.mxu0 0.0
        %2113 = vmatpush2.msra.mxu0 0.0
        %2114 = vmatprep.subr.mxu0 0.0
        %2115 = vmatpush2.msra.mxu0 0.0
        %2116 = vmatprep.subr.mxu0 0.0
        %2117 = vmatpush2.msra.mxu0 0.0
        %2118 = vmatprep.subr.mxu0 0.0
        %2119 = vmatpush2.msra.mxu0 0.0
        %2120 = vmatprep.subr.mxu0 0.0
        %2121 = vmatpush2.msra.mxu0 0.0
        %2122 = vmatprep.subr.mxu0 0.0
        %2123 = vmatpush2.msra.mxu0 0.0
        %2124 = vmatprep.subr.mxu0 0.0
        %2125 = vmatpush2.msra.mxu0 0.0
        %2126 = vmatprep.subr.mxu0 0.0
        %2127 = vmatpush2.msra.mxu0 0.0
        %2128 = vmatprep.subr.mxu0 0.0
        %2129 = vmatpush2.msra.mxu0 0.0
        %2130 = vmatprep.subr.mxu0 0.0
        %2131 = vmatpush2.msra.mxu0 0.0
        %2132 = vmatprep.subr.mxu0 0.0
        %2133 = vmatpush2.msra.mxu0 0.0
        %2134 = vmatprep.subr.mxu0 0.0
        %2135 = vmatpush2.msra.mxu0 0.0
        %2136 = vmatprep.subr.mxu0 0.0
        %2137 = vmatpush2.msra.mxu0 0.0
        %2138 = vmatprep.subr.mxu0 0.0
        %2139 = vmatpush2.msra.mxu0 0.0
        %2140 = vmatprep.subr.mxu0 0.0
        %2141 = vmatpush2.msra.mxu0 0.0
        %2142 = vmatprep.subr.mxu0 0.0
        %2143 = vmatpush2.msra.mxu0 0.0
        %2144 = vmatprep.mubr.f32.mxu0 0.0
        %2145 = vmatmul.mubr.f32.gmra.mxu0 %v2078
        %v2146 = vpop.f32.mrf.mxu0
        %v2147 = vadd.f32 0.0, %v2146
        %v2148 = vpop.f32.mrf.mxu0
        %2149 = vdwg.mxu0
        %v2150 = vmul.f32 %v2060, %v2060
        %v2151 = vmul.f32 %v2061, %v2061
        %v2152 = vmul.f32 %v2062, %v2062
        %v2153 = vmul.f32 %v2063, %v2063
        %v2154 = vmul.f32 %v2064, %v2064
        %v2155 = vmul.f32 %v2065, %v2065
        %v2156 = vmul.f32 %v2066, %v2066
        %v2157 = vmul.f32 %v2067, %v2067
        %2158 = vmatprep.subr.mxu0 0.0
        %2159 = vmatpush1.msra.mxu0 0.0
        %2160 = vmatprep.subr.mxu0 0.0
        %2161 = vmatpush1.msra.mxu0 0.0
        %2162 = vmatprep.subr.mxu0 0.0
        %2163 = vmatpush1.msra.mxu0 0.0
        %2164 = vmatprep.subr.mxu0 0.0
        %2165 = vmatpush1.msra.mxu0 0.0
        %2166 = vmatprep.subr.mxu0 0.0
        %2167 = vmatpush1.msra.mxu0 0.0
        %2168 = vmatprep.subr.mxu0 0.0
        %2169 = vmatpush1.msra.mxu0 0.0
        %2170 = vmatprep.subr.mxu0 0.0
        %2171 = vmatpush1.msra.mxu0 0.0
        %2172 = vmatprep.subr.mxu0 0.0
        %2173 = vmatpush1.msra.mxu0 0.0
        %2174 = vmatprep.subr.mxu0 0.0
        %2175 = vmatpush1.msra.mxu0 %v2157
        %2176 = vmatprep.subr.mxu0 0.0
        %2177 = vmatpush1.msra.mxu0 %v2156
        %2178 = vmatprep.subr.mxu0 0.0
        %2179 = vmatpush1.msra.mxu0 %v2155
        %2180 = vmatprep.subr.mxu0 0.0
        %2181 = vmatpush1.msra.mxu0 %v2154
        %2182 = vmatprep.subr.mxu0 0.0
        %2183 = vmatpush1.msra.mxu0 %v2153
        %2184 = vmatprep.subr.mxu0 0.0
        %2185 = vmatpush1.msra.mxu0 %v2152
        %2186 = vmatprep.subr.mxu0 0.0
        %2187 = vmatpush1.msra.mxu0 %v2151
        %2188 = vmatprep.subr.mxu0 0.0
        %2189 = vmatpush1.msra.mxu0 %v2150
        %2190 = vmatprep.subr.mxu0 0.0
        %2191 = vmatpush2.msra.mxu0 0.0
        %2192 = vmatprep.subr.mxu0 0.0
        %2193 = vmatpush2.msra.mxu0 0.0
        %2194 = vmatprep.subr.mxu0 0.0
        %2195 = vmatpush2.msra.mxu0 0.0
        %2196 = vmatprep.subr.mxu0 0.0
        %2197 = vmatpush2.msra.mxu0 0.0
        %2198 = vmatprep.subr.mxu0 0.0
        %2199 = vmatpush2.msra.mxu0 0.0
        %2200 = vmatprep.subr.mxu0 0.0
        %2201 = vmatpush2.msra.mxu0 0.0
        %2202 = vmatprep.subr.mxu0 0.0
        %2203 = vmatpush2.msra.mxu0 0.0
        %2204 = vmatprep.subr.mxu0 0.0
        %2205 = vmatpush2.msra.mxu0 0.0
        %2206 = vmatprep.subr.mxu0 0.0
        %2207 = vmatpush2.msra.mxu0 0.0
        %2208 = vmatprep.subr.mxu0 0.0
        %2209 = vmatpush2.msra.mxu0 0.0
        %2210 = vmatprep.subr.mxu0 0.0
        %2211 = vmatpush2.msra.mxu0 0.0
        %2212 = vmatprep.subr.mxu0 0.0
        %2213 = vmatpush2.msra.mxu0 0.0
        %2214 = vmatprep.subr.mxu0 0.0
        %2215 = vmatpush2.msra.mxu0 0.0
        %2216 = vmatprep.subr.mxu0 0.0
        %2217 = vmatpush2.msra.mxu0 0.0
        %2218 = vmatprep.subr.mxu0 0.0
        %2219 = vmatpush2.msra.mxu0 0.0
        %2220 = vmatprep.subr.mxu0 0.0
        %2221 = vmatpush2.msra.mxu0 0.0
        %2222 = vmatprep.mubr.f32.mxu0 0.0
        %2223 = vmatmul.mubr.f32.gmra.mxu0 %v2078
        %v2224 = vpop.f32.mrf.mxu0
        %v2225 = vadd.f32 0.0, %v2224
        %v2226 = vpop.f32.mrf.mxu0
        %2227 = vdwg.mxu0
        %v2228 = vmul.f32 %v2147, 0.055555556
        %v2229 = vmul.f32 %v2228, 18.0
        %v2230 = vmul.f32 %v2229, %v2228
        %v2231 = vsub.f32 %v2225, %v2230
        %v2232 = vmul.f32 %v2231, 0.05882353
        %v2233 = vmax.f32 %v2232, 0.0
        %v2234 = vadd.f32 %v2233, 1e-08
        %v2235 = vrsqrt.pop %v2234
        %v2236 = vmul.f32 %v2234, %v2235
        %vm2237 = vcmp.eq.f32.partialorder %v2234, inf
        %v2238 = vsel %vm2237, %v2234, %v2236
        %vm2239 = vcmp.eq.f32.partialorder %v2234, 0.0
        %v2240 = vand.u32 %v2234, 2147483648
        %v2241 = vsel %vm2239, %v2240, %v2238
        %v2242 = vld [vmem:[%s8 + $0xf] sm:$0x1]
        %v2243 = vld [vmem:[%s8 + $0x10] sm:$0x1]
        %v2244 = vld [vmem:[%s8 + $0x11] sm:$0x1]
        %v2245 = vld [vmem:[%s8 + $0x12] sm:$0x1]
        %v2246 = vld [vmem:[%s8 + $0x13] sm:$0x1]
        %v2247 = vld [vmem:[%s8 + $0x14] sm:$0x1]
        %v2248 = vld [vmem:[%s6] sm:$0xff]
        %v2249 = vld [vmem:[%s6 + $0x8] sm:$0xff]
        %v2250 = vld [vmem:[%s6 + $0x10] sm:$0xff]
        %v2251 = vld [vmem:[%s6 + $0x18] sm:$0xff]
        %v2252 = vld [vmem:[%s6 + $0x20] sm:$0xff]
        %v2253 = vld [vmem:[%s6 + $0x28] sm:$0xff]
        %v2254 = vld [vmem:[%s6 + $0x30] sm:$0xff]
        %v2255 = vld [vmem:[%s6 + $0x38] sm:$0xff]
        %v2256 = vld [vmem:[%s6 + $0x40] sm:$0xff]
        %v2257 = vld [vmem:[%s6 + $0x48] sm:$0xff]
        %v2258 = vld [vmem:[%s6 + $0x50] sm:$0xff]
        %v2259 = vld [vmem:[%s6 + $0x58] sm:$0xff]
        %v2260 = vld [vmem:[%s6 + $0x60] sm:$0xff]
        %v2261 = vld [vmem:[%s6 + $0x68] sm:$0xff]
        %v2262 = vld [vmem:[%s6 + $0x70] sm:$0xff]
        %v2263 = vld [vmem:[%s6 + $0x78] sm:$0xff]
        %v2264 = vld [vmem:[%s6 + $0x80] sm:$0xff]
        %v2265 = vld [vmem:[%s6 + $0x88] sm:$0xff]
        %v2266 = vld [vmem:[%s6 + $0x90] sm:$0xff]
        %v2267 = vld [vmem:[%s6 + $0x98] sm:$0xff]
        %v2268 = vld [vmem:[%s6 + $0xa0] sm:$0xff]
        %v2269 = vld [vmem:[%s6 + $0xa8] sm:$0xff]
        %v2270 = vld [vmem:[%s6 + $0xb0] sm:$0xff]
        %v2271 = vld [vmem:[%s6 + $0xb8] sm:$0xff]
        %v2272 = vld [vmem:[%s6 + $0xc0] sm:$0xff]
        %v2273 = vld [vmem:[%s6 + $0xc8] sm:$0xff]
        %v2274 = vld [vmem:[%s6 + $0xd0] sm:$0xff]
        %v2275 = vld [vmem:[%s6 + $0xd8] sm:$0xff]
        %v2276 = vld [vmem:[%s6 + $0xe0] sm:$0xff]
        %v2277 = vld [vmem:[%s6 + $0xe8] sm:$0xff]
        %v2278 = vld [vmem:[%s6 + $0xf0] sm:$0xff]
        %v2279 = vld [vmem:[%s6 + $0xf8] sm:$0xff]
        %2280 = vmatprep.subr.mxu0 0.0
        %2281 = vmatpush1.msra.mxu0 %v2279
        %2282 = vmatprep.subr.mxu0 0.0
        %2283 = vmatpush1.msra.mxu0 %v2278
        %2284 = vmatprep.subr.mxu0 0.0
        %2285 = vmatpush1.msra.mxu0 %v2277
        %2286 = vmatprep.subr.mxu0 0.0
        %2287 = vmatpush1.msra.mxu0 %v2276
        %2288 = vmatprep.subr.mxu0 0.0
        %2289 = vmatpush1.msra.mxu0 %v2275
        %2290 = vmatprep.subr.mxu0 0.0
        %2291 = vmatpush1.msra.mxu0 %v2274
        %2292 = vmatprep.subr.mxu0 0.0
        %2293 = vmatpush1.msra.mxu0 %v2273
        %2294 = vmatprep.subr.mxu0 0.0
        %2295 = vmatpush1.msra.mxu0 %v2272
        %2296 = vmatprep.subr.mxu0 0.0
        %2297 = vmatpush1.msra.mxu0 %v2271
        %2298 = vmatprep.subr.mxu0 0.0
        %2299 = vmatpush1.msra.mxu0 %v2270
        %2300 = vmatprep.subr.mxu0 0.0
        %2301 = vmatpush1.msra.mxu0 %v2269
        %2302 = vmatprep.subr.mxu0 0.0
        %2303 = vmatpush1.msra.mxu0 %v2268
        %2304 = vmatprep.subr.mxu0 0.0
        %2305 = vmatpush1.msra.mxu0 %v2267
        %2306 = vmatprep.subr.mxu0 0.0
        %2307 = vmatpush1.msra.mxu0 %v2266
        %2308 = vmatprep.subr.mxu0 0.0
        %2309 = vmatpush1.msra.mxu0 %v2265
        %2310 = vmatprep.subr.mxu0 0.0
        %2311 = vmatpush1.msra.mxu0 %v2264
        %2312 = vmatprep.subr.mxu0 0.0
        %2313 = vmatpush2.msra.mxu0 0.0
        %2314 = vmatprep.subr.mxu0 0.0
        %2315 = vmatpush2.msra.mxu0 0.0
        %2316 = vmatprep.subr.mxu0 0.0
        %2317 = vmatpush2.msra.mxu0 0.0
        %2318 = vmatprep.subr.mxu0 0.0
        %2319 = vmatpush2.msra.mxu0 0.0
        %2320 = vmatprep.subr.mxu0 0.0
        %2321 = vmatpush2.msra.mxu0 0.0
        %2322 = vmatprep.subr.mxu0 0.0
        %2323 = vmatpush2.msra.mxu0 0.0
        %2324 = vmatprep.subr.mxu0 0.0
        %2325 = vmatpush2.msra.mxu0 0.0
        %2326 = vmatprep.subr.mxu0 0.0
        %2327 = vmatpush2.msra.mxu0 0.0
        %2328 = vmatprep.subr.mxu0 0.0
        %2329 = vmatpush2.msra.mxu0 0.0
        %2330 = vmatprep.subr.mxu0 0.0
        %2331 = vmatpush2.msra.mxu0 0.0
        %2332 = vmatprep.subr.mxu0 0.0
        %2333 = vmatpush2.msra.mxu0 0.0
        %2334 = vmatprep.subr.mxu0 0.0
        %2335 = vmatpush2.msra.mxu0 0.0
        %2336 = vmatprep.subr.mxu0 0.0
        %2337 = vmatpush2.msra.mxu0 0.0
        %2338 = vmatprep.subr.mxu0 0.0
        %2339 = vmatpush2.msra.mxu0 0.0
        %2340 = vmatprep.subr.mxu0 0.0
        %2341 = vmatpush2.msra.mxu0 0.0
        %2342 = vmatprep.subr.mxu0 0.0
        %2343 = vmatpush2.msra.mxu0 0.0
        %2344 = vmatprep.mubr.f32.mxu0 0.0
        %2345 = vmatmul.mubr.f32.gmra.mxu0 %v2241
        %v2346 = vpop.f32.mrf.mxu0
        %v2347 = vadd.f32 0.0, %v2346
        %v2348 = vpop.f32.mrf.mxu0
        %2349 = vdwg.mxu0
        %2350 = vmatprep.subr.mxu0 0.0
        %2351 = vmatpush1.msra.mxu0 %v2263
        %2352 = vmatprep.subr.mxu0 0.0
        %2353 = vmatpush1.msra.mxu0 %v2262
        %2354 = vmatprep.subr.mxu0 0.0
        %2355 = vmatpush1.msra.mxu0 %v2261
        %2356 = vmatprep.subr.mxu0 0.0
        %2357 = vmatpush1.msra.mxu0 %v2260
        %2358 = vmatprep.subr.mxu0 0.0
        %2359 = vmatpush1.msra.mxu0 %v2259
        %2360 = vmatprep.subr.mxu0 0.0
        %2361 = vmatpush1.msra.mxu0 %v2258
        %2362 = vmatprep.subr.mxu0 0.0
        %2363 = vmatpush1.msra.mxu0 %v2257
        %2364 = vmatprep.subr.mxu0 0.0
        %2365 = vmatpush1.msra.mxu0 %v2256
        %2366 = vmatprep.subr.mxu0 0.0
        %2367 = vmatpush1.msra.mxu0 %v2255
        %2368 = vmatprep.subr.mxu0 0.0
        %2369 = vmatpush1.msra.mxu0 %v2254
        %2370 = vmatprep.subr.mxu0 0.0
        %2371 = vmatpush1.msra.mxu0 %v2253
        %2372 = vmatprep.subr.mxu0 0.0
        %2373 = vmatpush1.msra.mxu0 %v2252
        %2374 = vmatprep.subr.mxu0 0.0
        %2375 = vmatpush1.msra.mxu0 %v2251
        %2376 = vmatprep.subr.mxu0 0.0
        %2377 = vmatpush1.msra.mxu0 %v2250
        %2378 = vmatprep.subr.mxu0 0.0
        %2379 = vmatpush1.msra.mxu0 %v2249
        %2380 = vmatprep.subr.mxu0 0.0
        %2381 = vmatpush1.msra.mxu0 %v2248
        %2382 = vmatprep.subr.mxu0 0.0
        %2383 = vmatpush2.msra.mxu0 0.0
        %2384 = vmatprep.subr.mxu0 0.0
        %2385 = vmatpush2.msra.mxu0 0.0
        %2386 = vmatprep.subr.mxu0 0.0
        %2387 = vmatpush2.msra.mxu0 0.0
        %2388 = vmatprep.subr.mxu0 0.0
        %2389 = vmatpush2.msra.mxu0 0.0
        %2390 = vmatprep.subr.mxu0 0.0
        %2391 = vmatpush2.msra.mxu0 0.0
        %2392 = vmatprep.subr.mxu0 0.0
        %2393 = vmatpush2.msra.mxu0 0.0
        %2394 = vmatprep.subr.mxu0 0.0
        %2395 = vmatpush2.msra.mxu0 0.0
        %2396 = vmatprep.subr.mxu0 0.0
        %2397 = vmatpush2.msra.mxu0 0.0
        %2398 = vmatprep.subr.mxu0 0.0
        %2399 = vmatpush2.msra.mxu0 0.0
        %2400 = vmatprep.subr.mxu0 0.0
        %2401 = vmatpush2.msra.mxu0 0.0
        %2402 = vmatprep.subr.mxu0 0.0
        %2403 = vmatpush2.msra.mxu0 0.0
        %2404 = vmatprep.subr.mxu0 0.0
        %2405 = vmatpush2.msra.mxu0 0.0
        %2406 = vmatprep.subr.mxu0 0.0
        %2407 = vmatpush2.msra.mxu0 0.0
        %2408 = vmatprep.subr.mxu0 0.0
        %2409 = vmatpush2.msra.mxu0 0.0
        %2410 = vmatprep.subr.mxu0 0.0
        %2411 = vmatpush2.msra.mxu0 0.0
        %2412 = vmatprep.subr.mxu0 0.0
        %2413 = vmatpush2.msra.mxu0 0.0
        %2414 = vmatprep.mubr.f32.mxu0 0.0
        %2415 = vmatmul.mubr.f32.gmra.mxu0 %v2228
        %v2416 = vpop.f32.mrf.mxu0
        %v2417 = vadd.f32 %v2347, %v2416
        %v2418 = vpop.f32.mrf.mxu0
        %2419 = vdwg.mxu0
        %v2420 = vlaneseq
        %v2421 = vshrl.u32 %v2420, 7
        %v2422 = vsub.s32 0, %v2421
        %v2423 = vrot.slane %v2242, %v2422
        %v2424 = vadd.f32 %v2417, %v2423
        %vm2425 = vcmp.ge.f32.partialorder %v2424, 0.0
        %v2426 = vmul.f32 %v2243, 0.01
        %v2427 = vlaneseq
        %v2428 = vshrl.u32 %v2427, 7
        %v2429 = vsub.s32 0, %v2428
        %v2430 = vrot.slane %v2243, %v2429
        %v2431 = vlaneseq
        %v2432 = vshrl.u32 %v2431, 7
        %v2433 = vsub.s32 0, %v2432
        %v2434 = vrot.slane %v2426, %v2433
        %v2435 = vsel %vm2425, %v2430, %v2434
        %v2436 = vmul.f32 %v2424, %v2435
        %v2437 = vlaneseq
        %v2438 = vshrl.u32 %v2437, 7
        %v2439 = vsub.s32 0, %v2438
        %v2440 = vrot.slane %v2244, %v2439
        %v2441 = vadd.f32 %v2436, %v2440
        %v2442 = vld [vmem:[%s7] sm:$0xff]
        %v2443 = vld [vmem:[%s7 + $0x8] sm:$0xff]
        %v2444 = vld [vmem:[%s7 + $0x10] sm:$0xff]
        %v2445 = vld [vmem:[%s7 + $0x18] sm:$0xff]
        %v2446 = vlaneseq
        %v2447 = vshrl.u32 %v2446, 7
        %v2448 = vsub.s32 0, %v2447
        %v2449 = vrot.slane %v2245, %v2448
        %vm2450 = vcmask 261120
        %v2452 = vsel %vm2450, %v2441, 0
        %2454 = vmatprep.subr.mxu0 0.0
        %2455 = vmatpush1.msra.mxu0 0.0
        %2456 = vmatprep.subr.mxu0 0.0
        %2457 = vmatpush1.msra.mxu0 0.0
        %2458 = vmatprep.subr.mxu0 0.0
        %2459 = vmatpush1.msra.mxu0 0.0
        %2460 = vmatprep.subr.mxu0 0.0
        %2461 = vmatpush1.msra.mxu0 0.0
        %2462 = vmatprep.subr.mxu0 0.0
        %2463 = vmatpush1.msra.mxu0 0.0
        %2464 = vmatprep.subr.mxu0 0.0
        %2465 = vmatpush1.msra.mxu0 0.0
        %2466 = vmatprep.subr.mxu0 0.0
        %2467 = vmatpush1.msra.mxu0 0.0
        %2468 = vmatprep.subr.mxu0 0.0
        %2469 = vmatpush1.msra.mxu0 0.0
        %2470 = vmatprep.subr.mxu0 0.0
        %2471 = vmatpush1.msra.mxu0 0.0
        %2472 = vmatprep.subr.mxu0 0.0
        %2473 = vmatpush1.msra.mxu0 0.0
        %2474 = vmatprep.subr.mxu0 0.0
        %2475 = vmatpush1.msra.mxu0 0.0
        %2476 = vmatprep.subr.mxu0 0.0
        %2477 = vmatpush1.msra.mxu0 0.0
        %2478 = vmatprep.subr.mxu0 0.0
        %2479 = vmatpush1.msra.mxu0 %v2445
        %2480 = vmatprep.subr.mxu0 0.0
        %2481 = vmatpush1.msra.mxu0 %v2444
        %2482 = vmatprep.subr.mxu0 0.0
        %2483 = vmatpush1.msra.mxu0 %v2443
        %2484 = vmatprep.subr.mxu0 0.0
        %2485 = vmatpush1.msra.mxu0 %v2442
        %2486 = vmatprep.subr.mxu0 0.0
        %2487 = vmatpush2.msra.mxu0 0.0
        %2488 = vmatprep.subr.mxu0 0.0
        %2489 = vmatpush2.msra.mxu0 0.0
        %2490 = vmatprep.subr.mxu0 0.0
        %2491 = vmatpush2.msra.mxu0 0.0
        %2492 = vmatprep.subr.mxu0 0.0
        %2493 = vmatpush2.msra.mxu0 0.0
        %2494 = vmatprep.subr.mxu0 0.0
        %2495 = vmatpush2.msra.mxu0 0.0
        %2496 = vmatprep.subr.mxu0 0.0
        %2497 = vmatpush2.msra.mxu0 0.0
        %2498 = vmatprep.subr.mxu0 0.0
        %2499 = vmatpush2.msra.mxu0 0.0
        %2500 = vmatprep.subr.mxu0 0.0
        %2501 = vmatpush2.msra.mxu0 0.0
        %2502 = vmatprep.subr.mxu0 0.0
        %2503 = vmatpush2.msra.mxu0 0.0
        %2504 = vmatprep.subr.mxu0 0.0
        %2505 = vmatpush2.msra.mxu0 0.0
        %2506 = vmatprep.subr.mxu0 0.0
        %2507 = vmatpush2.msra.mxu0 0.0
        %2508 = vmatprep.subr.mxu0 0.0
        %2509 = vmatpush2.msra.mxu0 0.0
        %2510 = vmatprep.subr.mxu0 0.0
        %2511 = vmatpush2.msra.mxu0 0.0
        %2512 = vmatprep.subr.mxu0 0.0
        %2513 = vmatpush2.msra.mxu0 0.0
        %2514 = vmatprep.subr.mxu0 0.0
        %2515 = vmatpush2.msra.mxu0 0.0
        %2516 = vmatprep.subr.mxu0 0.0
        %2517 = vmatpush2.msra.mxu0 0.0
        %2518 = vmatprep.mubr.f32.mxu0 0.0
        %2519 = vmatmul.mubr.f32.gmra.mxu0 %v2452
        %v2520 = vpop.f32.mrf.mxu0
        %v2521 = vadd.f32 %v2449, %v2520
        %v2522 = vpop.f32.mrf.mxu0
        %2523 = vdwg.mxu0
        %vm2524 = vcmp.ge.f32.partialorder %v2521, 0.0
        %v2525 = vmul.f32 %v2246, 0.01
        %v2526 = vlaneseq
        %v2527 = vshrl.u32 %v2526, 7
        %v2528 = vsub.s32 0, %v2527
        %v2529 = vrot.slane %v2246, %v2528
        %v2530 = vlaneseq
        %v2531 = vshrl.u32 %v2530, 7
        %v2532 = vsub.s32 0, %v2531
        %v2533 = vrot.slane %v2525, %v2532
        %v2534 = vsel %vm2524, %v2529, %v2533
        %v2535 = vmul.f32 %v2521, %v2534
        %v2536 = vlaneseq
        %v2537 = vshrl.u32 %v2536, 7
        %v2538 = vsub.s32 0, %v2537
        %v2539 = vrot.slane %v2247, %v2538
        %v2540 = vadd.f32 %v2535, %v2539
        %vm2541 = vcmask 254976
        %2542 = vst.msk [vmem:[%s326] sm:$0x3] %vm2541, %v2540
        %s2543 = sand.u32 %s225, 1
        %s2544 = scalar_lea.sflag [#allocation3], %s2543
        %s2545 = sand.u32 %s225, 1
        %s2546 = smul.addr %s2545, 2
        %s2547 = scalar_lea.vmem [#allocation2], %s2546
        // Predicated region
        $region57: #{xvector_forward.1} parent=55 // pred_check
          %p2548 = pneg %p235
        $region58: #{xvector_forward.1} parent=55 // pred_check_branch
          %2550 = sbr.rel (%p2548) target = $region60
        $region59: #{xvector_forward.1} parent=55 // pred_region
          %s2552 = ssub.s32 32, 32
          %2553 = vsyncadd %s2544, %s2552
          %s2554 = smul.addr %s23, 32
          %s2555 = scalar_lea.hbm %s9, %s2554
          %s2557 = sshll.u32 %s2547, 4
          %s2558 = int_to_ptr.vmem [resolvable:$true] %s2557
          %2560 = dma.vmem_to_hbm [thread:$0]  %s2558, 32, %s2555, %s2544
        $region60: #{xvector_forward.1} parent=55 // pred_fallthru
          _
      $region56: #{xvector_forward.1} parent=5 // pred_fallthru
        _
      %p2561 = scmp.le.s32.totalorder 2, %s18
      // Predicated region
      $region61: #{xvector_forward.1} parent=5 // pred_check
        %p2562 = pneg %p2561
      $region62: #{xvector_forward.1} parent=5 // pred_check_branch
        %2564 = sbr.rel (%p2562) target = $region64
      $region63: #{xvector_forward.1} parent=5 // pred_region
        %s2565 = ssub.s32 %s18, 2
        // Predicated region
        $region65: #{xvector_forward.1} parent=63 // pred_check
          %p2566 = pneg %p241
        $region66: #{xvector_forward.1} parent=63 // pred_check_branch
          %2568 = sbr.rel (%p2566) target = $region68
        $region67: #{xvector_forward.1} parent=63 // pred_region
          %s2569 = sand.u32 %s226, 1
          %s2570 = scalar_lea.sflag [#allocation3], %s2569
          %s2571 = sand.u32 %s226, 1
          %s2572 = smul.addr %s2571, 2
          %s2573 = scalar_lea.vmem [#allocation2], %s2572
          %2574 = dma.done %s2570, 32
        $region68: #{xvector_forward.1} parent=63 // pred_fallthru
          _
      $region64: #{xvector_forward.1} parent=5 // pred_fallthru
        _
    $region6: #{xvector_forward.1} parent=1 // loop_footer
      %s22 = sadd.s32 1, %s18
    $region7: #{xvector_forward.1} parent=1 // loop_footer_branch
      %17 = sbr.rel target = $region3
    $region8: #{xvector_forward.1} parent=1 // loop_exit
      _
    %2575 = vsyncpa [#allocation3], 1
    %s2576 = scalar_lea.sflag [#allocation3], 1
    %2577 = vsyncpa %s2576, 1

</llo_original>
